<compile_context>
chip_gen: v7x
topology: tpu7x:2x2x1
jax: 0.10.0
libtpu: 0.0.40
codegen_flags: <defaults>
</compile_context>

<pallas_src>
import math
from functools import partial

import jax
import jax.numpy as jnp
from jax.experimental import pallas as pl
from jax.experimental.pallas import tpu as pltpu


# ---------------------------------------------------------------------------
# Helpers
# ---------------------------------------------------------------------------
def _round_up(x, m):
    return ((x + m - 1) // m) * m


def _pick_time_chunk(seq_len, max_chunk=32):
    """Largest divisor of seq_len <= max_chunk (keeps the grid exact; no time
    padding, so the recurrent state at the final step is never corrupted)."""
    for c in range(min(seq_len, max_chunk), 0, -1):
        if seq_len % c == 0:
            return c
    return 1


def _vmem_limit_bytes(t_chunk, b_pad, feat, h_pad, out_pad=0):
    four_h = 4 * h_pad
    est = 0
    est += 2 * t_chunk * b_pad * feat * 2          # x chunk (bf16) x2 buffers
    est += 2 * t_chunk * b_pad * h_pad * 4         # out chunk (f32) x2 buffers
    est += t_chunk * b_pad * four_h * 4            # gx scratch (f32)
    est += 2 * (feat * four_h * 2 + h_pad * four_h * 2 + four_h * 4)  # weights
    est += 4 * b_pad * h_pad * 4                   # h/c scratch + c_n block
    if out_pad:
        est += 2 * (h_pad * out_pad * 2 + out_pad * 4 + b_pad * out_pad * 4)
    # Clamp: at least the comfortable default, never above ~3/4 of v7x's 64MiB.
    return int(min(max(2 * est, 16 * 2**20), 48 * 2**20))


# ---------------------------------------------------------------------------
# Shared per-chunk recurrence.  gx_scr holds the hoisted projection for this
# chunk (sublane-aligned rows, 128-lane-aligned gate blocks).  Only the
# (B_pad, H_pad) @ (H_pad, 4*H_pad) matmul sits on the serial critical path.
# ---------------------------------------------------------------------------
def _run_chunk(gx_scr, whh_ref, h_scr, c_scr, out_ref, *,
               t_chunk, b_pad, h_pad, skip_first_matmul):
    H = h_pad
    h = h_scr[...]
    c = c_scr[...]
    for t in range(t_chunk):                       # static, bounded unroll
        gx_t = gx_scr[t * b_pad:(t + 1) * b_pad, :]          # aligned vld
        if t == 0 and skip_first_matmul:
            g = gx_t                               # h0 == 0 -> skip MXU push
        else:
            g = gx_t + jnp.dot(h.astype(jnp.bfloat16), whh_ref[...],
                               preferred_element_type=jnp.float32)
        # PyTorch gate ordering: i, f, g, o — each slice 128-lane aligned.
        i_g = jax.nn.sigmoid(g[:, 0 * H:1 * H])
        f_g = jax.nn.sigmoid(g[:, 1 * H:2 * H])
        g_g = jnp.tanh(g[:, 2 * H:3 * H])
        o_g = jax.nn.sigmoid(g[:, 3 * H:4 * H])
        c = f_g * c + i_g * g_g
        h = o_g * jnp.tanh(c)
        if out_ref is not None:
            out_ref[t] = h                          # full-tile unmasked vst
    h_scr[...] = h
    c_scr[...] = c


# ---------------------------------------------------------------------------
# Kernel A: full LSTM output + final cell state (add_linear=False branch).
# ---------------------------------------------------------------------------
def _lstm_seq_kernel(x_ref, wih_ref, whh_ref, b_ref, out_ref, cn_ref,
                     h_scr, c_scr, gx_scr, *, t_chunk, b_pad, h_pad, num_chunks):
    @pl.when(pl.program_id(0) == 0)
    def _():
        h_scr[...] = jnp.zeros_like(h_scr)
        c_scr[...] = jnp.zeros_like(c_scr)

    # Hoisted input projection for the whole chunk (bf16 MXU, f32 accumulate).
    x2d = x_ref[...].reshape(t_chunk * b_pad, x_ref.shape[-1])
    gx_scr[...] = (jnp.dot(x2d, wih_ref[...], preferred_element_type=jnp.float32)
                   + b_ref[...])

    _run_chunk(gx_scr, whh_ref, h_scr, c_scr, out_ref,
               t_chunk=t_chunk, b_pad=b_pad, h_pad=h_pad,
               skip_first_matmul=(num_chunks == 1))

    cn_ref[0] = c_scr[...]      # resident block; DMA'd back to HBM once at end
    # h_n is not emitted: it equals output[-1] and is sliced in the wrapper.


# ---------------------------------------------------------------------------
# Kernel B: LSTM + fused Linear(h_n) (add_linear=True branch).
# ---------------------------------------------------------------------------
def _lstm_linear_kernel(x_ref, wih_ref, whh_ref, b_ref, wlin_ref, blin_ref,
                        y_ref, h_scr, c_scr, gx_scr, *,
                        t_chunk, b_pad, h_pad, num_chunks):
    @pl.when(pl.program_id(0) == 0)
    def _():
        h_scr[...] = jnp.zeros_like(h_scr)
        c_scr[...] = jnp.zeros_like(c_scr)

    x2d = x_ref[...].reshape(t_chunk * b_pad, x_ref.shape[-1])
    gx_scr[...] = (jnp.dot(x2d, wih_ref[...], preferred_element_type=jnp.float32)
                   + b_ref[...])

    _run_chunk(gx_scr, whh_ref, h_scr, c_scr, None,
               t_chunk=t_chunk, b_pad=b_pad, h_pad=h_pad,
               skip_first_matmul=(num_chunks == 1))

    @pl.when(pl.program_id(0) == pl.num_programs(0) - 1)
    def _():
        y_ref[...] = (jnp.dot(h_scr[...].astype(jnp.bfloat16), wlin_ref[...],
                              preferred_element_type=jnp.float32)
                      + blin_ref[...])


# ---------------------------------------------------------------------------
# Wrapper-side padding / layout plumbing.
# ---------------------------------------------------------------------------
def _prep_operands(x, w_ih, w_hh, b_ih, b_hh):
    seq_len, batch, n_features = x.shape
    H = w_hh.shape[1]
    B_pad = _round_up(batch, 8)
    H_pad = _round_up(H, 128)

    # Zero-pad batch; cast to bf16 for the MXU projection (halves DMA bytes).
    x_p = jnp.zeros((seq_len, B_pad, n_features), jnp.bfloat16)
    x_p = x_p.at[:, :batch, :].set(x.astype(jnp.bfloat16))

    def pad_gate_rows(w):                       # (4H, K) -> (4*H_pad, K)
        K = w.shape[1]
        w4 = w.reshape(4, H, K)
        return (jnp.zeros((4, H_pad, K), w.dtype)
                .at[:, :H, :].set(w4).reshape(4 * H_pad, K))

    w_ih_p = pad_gate_rows(jnp.asarray(w_ih, jnp.float32))       # (4H_pad, F)
    w_hh_p = pad_gate_rows(jnp.asarray(w_hh, jnp.float32))       # (4H_pad, H)
    w_hh_p = (jnp.zeros((4 * H_pad, H_pad), jnp.float32)
              .at[:, :H].set(w_hh_p))                            # (4H_pad, H_pad)

    b = (jnp.asarray(b_ih, jnp.float32) + jnp.asarray(b_hh, jnp.float32))
    b_p = (jnp.zeros((4, H_pad), jnp.float32)
           .at[:, :H].set(b.reshape(4, H)).reshape(1, 4 * H_pad))

    wih_t = w_ih_p.T.astype(jnp.bfloat16)       # (F, 4H_pad)
    whh_t = w_hh_p.T.astype(jnp.bfloat16)       # (H_pad, 4H_pad)
    return x_p, wih_t, whh_t, b_p, seq_len, batch, B_pad, H, H_pad


def lstm_forward(x, w_ih, w_hh, b_ih, b_hh, *, max_chunk=32):
    """Single-layer, unidirectional LSTM. x: (seq_len, batch, n_features)."""
    x_p, wih_t, whh_t, b_p, S, batch, B_pad, H, H_pad = _prep_operands(
        x, w_ih, w_hh, b_ih, b_hh)
    F = x_p.shape[-1]
    T = _pick_time_chunk(S, max_chunk)
    n_chunks = S // T

    kernel = partial(_lstm_seq_kernel, t_chunk=T, b_pad=B_pad, h_pad=H_pad,
                     num_chunks=n_chunks)
    out_p, cn_p = pl.pallas_call(
        kernel,
        out_shape=(jax.ShapeDtypeStruct((S, B_pad, H_pad), jnp.float32),
                   jax.ShapeDtypeStruct((1, B_pad, H_pad), jnp.float32)),
        grid_spec=pltpu.PrefetchScalarGridSpec(
            num_scalar_prefetch=0,
            grid=(n_chunks,),
            in_specs=[
                pl.BlockSpec((T, B_pad, F), lambda t: (t, 0, 0)),        # x chunk
                pl.BlockSpec((F, 4 * H_pad), lambda t: (0, 0)),          # resident
                pl.BlockSpec((H_pad, 4 * H_pad), lambda t: (0, 0)),      # resident
                pl.BlockSpec((1, 4 * H_pad), lambda t: (0, 0)),          # resident
            ],
            out_specs=[
                pl.BlockSpec((T, B_pad, H_pad), lambda t: (t, 0, 0)),    # out chunk
                pl.BlockSpec((1, B_pad, H_pad), lambda t: (0, 0, 0)),    # c_n acc
            ],
            scratch_shapes=[
                pltpu.VMEM((B_pad, H_pad), jnp.float32),                 # h carry
                pltpu.VMEM((B_pad, H_pad), jnp.float32),                 # c carry
                pltpu.VMEM((T * B_pad, 4 * H_pad), jnp.float32),         # gx chunk
            ]),
        compiler_params=pltpu.CompilerParams(
            dimension_semantics=("arbitrary",),
            vmem_limit_bytes=_vmem_limit_bytes(T, B_pad, F, H_pad)),
    )(x_p, wih_t, whh_t, b_p)

    output = out_p[:, :batch, :H]
    c_n = cn_p[:, :batch, :H]
    h_n = output[-1:]            # h_n for a 1-layer LSTM == last timestep output
    return output, (h_n, c_n)


def lstm_linear_forward(x, w_ih, w_hh, b_ih, b_hh, w_lin, b_lin, *, max_chunk=32):
    """Fused LSTM + Linear(h_n[-1]) in one kernel. Returns (batch, out)."""
    x_p, wih_t, whh_t, b_p, S, batch, B_pad, H, H_pad = _prep_operands(
        x, w_ih, w_hh, b_ih, b_hh)
    F = x_p.shape[-1]
    out_f = w_lin.shape[0]
    out_pad = _round_up(out_f, 128)
    T = _pick_time_chunk(S, max_chunk)
    n_chunks = S // T

    wlin_t = (jnp.zeros((H_pad, out_pad), jnp.float32)
              .at[:H, :out_f].set(jnp.asarray(w_lin, jnp.float32).T)
              .astype(jnp.bfloat16))
    blin = (jnp.zeros((1, out_pad), jnp.float32)
            .at[0, :out_f].set(jnp.asarray(b_lin, jnp.float32)))

    kernel = partial(_lstm_linear_kernel, t_chunk=T, b_pad=B_pad, h_pad=H_pad,
                     num_chunks=n_chunks)
    y_p = pl.pallas_call(
        kernel,
        out_shape=jax.ShapeDtypeStruct((B_pad, out_pad), jnp.float32),
        grid_spec=pltpu.PrefetchScalarGridSpec(
            num_scalar_prefetch=0,
            grid=(n_chunks,),
            in_specs=[
                pl.BlockSpec((T, B_pad, F), lambda t: (t, 0, 0)),
                pl.BlockSpec((F, 4 * H_pad), lambda t: (0, 0)),
                pl.BlockSpec((H_pad, 4 * H_pad), lambda t: (0, 0)),
                pl.BlockSpec((1, 4 * H_pad), lambda t: (0, 0)),
                pl.BlockSpec((H_pad, out_pad), lambda t: (0, 0)),
                pl.BlockSpec((1, out_pad), lambda t: (0, 0)),
            ],
            out_specs=pl.BlockSpec((B_pad, out_pad), lambda t: (0, 0)),
            scratch_shapes=[
                pltpu.VMEM((B_pad, H_pad), jnp.float32),
                pltpu.VMEM((B_pad, H_pad), jnp.float32),
                pltpu.VMEM((T * B_pad, 4 * H_pad), jnp.float32),
            ]),
        compiler_params=pltpu.CompilerParams(
            dimension_semantics=("arbitrary",),
            vmem_limit_bytes=_vmem_limit_bytes(T, B_pad, F, H_pad, out_pad)),
    )(x_p, wih_t, whh_t, b_p, wlin_t, blin)

    return y_p[:batch, :out_f]


# ---------------------------------------------------------------------------
# Encoder module (PyTorch-style uniform(-1/sqrt(H), 1/sqrt(H)) init).
# ---------------------------------------------------------------------------
class EncoderPallas:
    def __init__(self, seq_length, n_features, output_length, hidden_size,
                 num_layers=1, batch_first=False, dropout=0.0,
                 bidirectional=False, add_linear=False, key=None):
        assert num_layers == 1 and not bidirectional and not batch_first, \
            "This Pallas port supports num_layers=1, unidirectional, seq-first."
        self.seq_length = seq_length
        self.n_features = n_features
        self.output_length = output_length
        self.hidden_size = hidden_size
        self.n_direction = 1
        self.add_linear = add_linear

        key = jax.random.PRNGKey(0) if key is None else key
        k = 1.0 / math.sqrt(hidden_size)
        ks = jax.random.split(key, 6)
        H4 = 4 * hidden_size
        self.w_ih = jax.random.uniform(ks[0], (H4, n_features), jnp.float32, -k, k)
        self.w_hh = jax.random.uniform(ks[1], (H4, hidden_size), jnp.float32, -k, k)
        self.b_ih = jax.random.uniform(ks[2], (H4,), jnp.float32, -k, k)
        self.b_hh = jax.random.uniform(ks[3], (H4,), jnp.float32, -k, k)
        if add_linear:
            kl = 1.0 / math.sqrt(hidden_size * self.n_direction)
            self.w_lin = jax.random.uniform(
                ks[4], (output_length, hidden_size * self.n_direction),
                jnp.float32, -kl, kl)
            self.b_lin = jax.random.uniform(
                ks[5], (output_length,), jnp.float32, -kl, kl)

    def __call__(self, seq):
        if self.add_linear:
            return lstm_linear_forward(seq, self.w_ih, self.w_hh,
                                       self.b_ih, self.b_hh,
                                       self.w_lin, self.b_lin)
        return lstm_forward(seq, self.w_ih, self.w_hh, self.b_ih, self.b_hh)


# ---------------------------------------------------------------------------
# Pure-JAX reference (for correctness checking).
# ---------------------------------------------------------------------------
def lstm_reference(x, w_ih, w_hh, b_ih, b_hh):
    H = w_hh.shape[1]
    b = b_ih + b_hh

    def step(carry, x_t):
        h, c = carry
        gates = x_t @ w_ih.T + h @ w_hh.T + b
        i = jax.nn.sigmoid(gates[:, 0 * H:1 * H])
        f = jax.nn.sigmoid(gates[:, 1 * H:2 * H])
        g = jnp.tanh(gates[:, 2 * H:3 * H])
        o = jax.nn.sigmoid(gates[:, 3 * H:4 * H])
        c_new = f * c + i * g
        h_new = o * jnp.tanh(c_new)
        return (h_new, c_new), h_new

    batch = x.shape[1]
    init = (jnp.zeros((batch, H), jnp.float32), jnp.zeros((batch, H), jnp.float32))
    (h_n, c_n), outs = jax.lax.scan(step, init, x)
    return outs, (h_n[None], c_n[None])


if __name__ == "__main__":
    seq_length, batch, n_features, hidden_size, output_length = 8, 4, 16, 32, 16

    key = jax.random.PRNGKey(0)
    x = jax.random.normal(key, (seq_length, batch, n_features), jnp.float32)

    # --- add_linear=False branch: returns (output, (h_n, c_n)) ---
    enc = EncoderPallas(seq_length, n_features, output_length, hidden_size,
                        add_linear=False, key=jax.random.PRNGKey(1))
    output, (h_n, c_n) = enc(x)
    jax.block_until_ready((output, h_n, c_n))

    ref_out, (ref_h, ref_c) = lstm_reference(
        x, enc.w_ih, enc.w_hh, enc.b_ih, enc.b_hh)
    assert output.shape == (seq_length, batch, hidden_size)
    assert h_n.shape == (1, batch, hidden_size)
    assert c_n.shape == (1, batch, hidden_size)
    # bf16 MXU operands with f32 accumulation -> relaxed but tight tolerances.
    assert jnp.allclose(output, ref_out, atol=2e-2, rtol=2e-2)
    assert jnp.allclose(h_n, ref_h, atol=2e-2, rtol=2e-2)
    assert jnp.allclose(c_n, ref_c, atol=2e-2, rtol=2e-2)

    # --- add_linear=True branch: returns linear(h_n of last layer) ---
    enc_lin = EncoderPallas(seq_length, n_features, output_length, hidden_size,
                            add_linear=True, key=jax.random.PRNGKey(2))
    y = enc_lin(x)
    jax.block_until_ready(y)

    _, (ref_h2, _) = lstm_reference(
        x, enc_lin.w_ih, enc_lin.w_hh, enc_lin.b_ih, enc_lin.b_hh)
    ref_y = ref_h2[-1] @ enc_lin.w_lin.T + enc_lin.b_lin
    assert y.shape == (batch, output_length)
    assert jnp.allclose(y, ref_y, atol=2e-2, rtol=2e-2)

    print("KERNEL_OK")
</pallas_src>

<mosaic_0001>
module attributes {stable_mosaic.version = 11 : i64} {
  func.func @_lstm_seq_kernel(%arg0: i32, %arg1: memref<8x8x16xbf16, #tpu.memory_space<vmem>>, %arg2: memref<16x512xbf16, #tpu.memory_space<vmem>>, %arg3: memref<128x512xbf16, #tpu.memory_space<vmem>>, %arg4: memref<1x512xf32, #tpu.memory_space<vmem>>, %arg5: memref<8x8x128xf32, #tpu.memory_space<vmem>>, %arg6: memref<1x8x128xf32, #tpu.memory_space<vmem>>, %arg7: memref<8x128xf32, #tpu.memory_space<vmem>>, %arg8: memref<8x128xf32, #tpu.memory_space<vmem>>, %arg9: memref<64x512xf32, #tpu.memory_space<vmem>>) attributes {dimension_semantics = [#tpu.dimension_semantics<arbitrary>], iteration_bounds = array<i64: 1>, scalar_prefetch = 0 : i64, scratch_operands = 3 : i64, tpu.core_type = #tpu.core_type<tc>, window_params = [{transform_indices = @transform_0, window_bounds = array<i64: 8, 8, 16>}, {pipeline_mode = #tpu.pipeline_mode<synchronous>, transform_indices = @transform_1, window_bounds = array<i64: 16, 512>}, {pipeline_mode = #tpu.pipeline_mode<synchronous>, transform_indices = @transform_2, window_bounds = array<i64: 128, 512>}, {pipeline_mode = #tpu.pipeline_mode<synchronous>, transform_indices = @transform_3, window_bounds = array<i64: 1, 512>}, {transform_indices = @transform_4, window_bounds = array<i64: 8, 8, 128>}, {pipeline_mode = #tpu.pipeline_mode<synchronous>, transform_indices = @transform_5, window_bounds = array<i64: 1, 8, 128>}]} {
    %c0_i32 = arith.constant 0 : i32
    %0 = arith.cmpi eq, %arg0, %c0_i32 : i32
    %1 = arith.extui %0 : i1 to i32
    %c0_i32_0 = arith.constant 0 : i32
    %2 = arith.cmpi ne, %1, %c0_i32_0 : i32
    scf.if %2 {
      %cst_91 = arith.constant 0.000000e+00 : f32
      %278 = vector.broadcast %cst_91 : f32 to vector<8x128xf32>
      %c0_92 = arith.constant 0 : index
      %c0_93 = arith.constant 0 : index
      %279 = vector.load %arg7[%c0_92, %c0_93] : memref<8x128xf32, #tpu.memory_space<vmem>>, vector<8x128xf32>
      tpu.vector_store %arg7[%c0_92, %c0_93], %278 {strides = array<i32>} : memref<8x128xf32, #tpu.memory_space<vmem>>, vector<8x128xf32>,
      %cst_94 = arith.constant 0.000000e+00 : f32
      %280 = vector.broadcast %cst_94 : f32 to vector<8x128xf32>
      %c0_95 = arith.constant 0 : index
      %c0_96 = arith.constant 0 : index
      %281 = vector.load %arg8[%c0_95, %c0_96] : memref<8x128xf32, #tpu.memory_space<vmem>>, vector<8x128xf32>
      tpu.vector_store %arg8[%c0_95, %c0_96], %280 {strides = array<i32>} : memref<8x128xf32, #tpu.memory_space<vmem>>, vector<8x128xf32>,
    } else {
    }
    %c0 = arith.constant 0 : index
    %c0_1 = arith.constant 0 : index
    %c0_2 = arith.constant 0 : index
    %3 = vector.load %arg1[%c0, %c0_1, %c0_2] : memref<8x8x16xbf16, #tpu.memory_space<vmem>>, vector<8x8x16xbf16>
    %4 = vector.shape_cast %3 : vector<8x8x16xbf16> to vector<64x16xbf16>
    %c0_3 = arith.constant 0 : index
    %c0_4 = arith.constant 0 : index
    %5 = vector.load %arg2[%c0_3, %c0_4] : memref<16x512xbf16, #tpu.memory_space<vmem>>, vector<16x512xbf16>
    %cst = arith.constant dense<0.000000e+00> : vector<64x512xf32>
    %6 = tpu.matmul %4, %5, %cst {dimension_numbers = #tpu.dot_dimension_numbers<[1], [0], [0], [1], [0, 0, 1, 1], [], []>} : vector<64x16xbf16>, vector<16x512xbf16>, vector<64x512xf32> -> vector<64x512xf32>
    %c0_5 = arith.constant 0 : index
    %c0_6 = arith.constant 0 : index
    %7 = vector.load %arg4[%c0_5, %c0_6] : memref<1x512xf32, #tpu.memory_space<vmem>>, vector<1x512xf32>
    %8 = vector.broadcast %7 : vector<1x512xf32> to vector<64x512xf32>
    %9 = arith.addf %6, %8 : vector<64x512xf32>
    %c0_7 = arith.constant 0 : index
    %c0_8 = arith.constant 0 : index
    %10 = vector.load %arg9[%c0_7, %c0_8] : memref<64x512xf32, #tpu.memory_space<vmem>>, vector<64x512xf32>
    tpu.vector_store %arg9[%c0_7, %c0_8], %9 {strides = array<i32>} : memref<64x512xf32, #tpu.memory_space<vmem>>, vector<64x512xf32>,
    %c0_9 = arith.constant 0 : index
    %c0_10 = arith.constant 0 : index
    %11 = vector.load %arg8[%c0_9, %c0_10] : memref<8x128xf32, #tpu.memory_space<vmem>>, vector<8x128xf32>
    %c0_11 = arith.constant 0 : index
    %c0_12 = arith.constant 0 : index
    %12 = vector.load %arg9[%c0_11, %c0_12] : memref<64x512xf32, #tpu.memory_space<vmem>>, vector<8x512xf32>
    %13 = vector.extract_strided_slice %12 {offsets = [0, 0], sizes = [8, 128], strides = [1, 1]} : vector<8x512xf32> to vector<8x128xf32>
    %14 = arith.negf %13 : vector<8x128xf32>
    %15 = math.exp %14 : vector<8x128xf32>
    %cst_13 = arith.constant 1.000000e+00 : f32
    %16 = vector.broadcast %cst_13 : f32 to vector<8x128xf32>
    %17 = arith.addf %16, %15 : vector<8x128xf32>
    %18 = arith.divf %16, %17 : vector<8x128xf32>
    %19 = vector.extract_strided_slice %12 {offsets = [0, 128], sizes = [8, 128], strides = [1, 1]} : vector<8x512xf32> to vector<8x128xf32>
    %20 = arith.negf %19 : vector<8x128xf32>
    %21 = math.exp %20 : vector<8x128xf32>
    %cst_14 = arith.constant 1.000000e+00 : f32
    %22 = vector.broadcast %cst_14 : f32 to vector<8x128xf32>
    %23 = arith.addf %22, %21 : vector<8x128xf32>
    %24 = arith.divf %22, %23 : vector<8x128xf32>
    %25 = vector.extract_strided_slice %12 {offsets = [0, 256], sizes = [8, 128], strides = [1, 1]} : vector<8x512xf32> to vector<8x128xf32>
    %26 = math.tanh %25 : vector<8x128xf32>
    %27 = vector.extract_strided_slice %12 {offsets = [0, 384], sizes = [8, 128], strides = [1, 1]} : vector<8x512xf32> to vector<8x128xf32>
    %28 = arith.negf %27 : vector<8x128xf32>
    %29 = math.exp %28 : vector<8x128xf32>
    %cst_15 = arith.constant 1.000000e+00 : f32
    %30 = vector.broadcast %cst_15 : f32 to vector<8x128xf32>
    %31 = arith.addf %30, %29 : vector<8x128xf32>
    %32 = arith.divf %30, %31 : vector<8x128xf32>
    %33 = arith.mulf %24, %11 : vector<8x128xf32>
    %34 = arith.mulf %18, %26 : vector<8x128xf32>
    %35 = arith.addf %33, %34 : vector<8x128xf32>
    %36 = math.tanh %35 : vector<8x128xf32>
    %37 = arith.mulf %32, %36 : vector<8x128xf32>
    %c0_16 = arith.constant 0 : index
    %c0_17 = arith.constant 0 : index
    %c0_18 = arith.constant 0 : index
    %38 = vector.load %arg5[%c0_16, %c0_17, %c0_18] : memref<8x8x128xf32, #tpu.memory_space<vmem>>, vector<1x8x128xf32>
    %39 = vector.shape_cast %38 : vector<1x8x128xf32> to vector<8x128xf32>
    %40 = vector.shape_cast %37 : vector<8x128xf32> to vector<1x8x128xf32>
    tpu.vector_store %arg5[%c0_16, %c0_17, %c0_18], %40 {strides = array<i32>} : memref<8x8x128xf32, #tpu.memory_space<vmem>>, vector<1x8x128xf32>,
    %c8 = arith.constant 8 : index
    %c0_19 = arith.constant 0 : index
    %41 = vector.load %arg9[%c8, %c0_19] : memref<64x512xf32, #tpu.memory_space<vmem>>, vector<8x512xf32>
    %42 = arith.truncf %37 : vector<8x128xf32> to vector<8x128xbf16>
    %c0_20 = arith.constant 0 : index
    %c0_21 = arith.constant 0 : index
    %43 = vector.load %arg3[%c0_20, %c0_21] : memref<128x512xbf16, #tpu.memory_space<vmem>>, vector<128x512xbf16>
    %cst_22 = arith.constant dense<0.000000e+00> : vector<8x512xf32>
    %44 = tpu.matmul %42, %43, %cst_22 {dimension_numbers = #tpu.dot_dimension_numbers<[1], [0], [0], [1], [0, 0, 1, 1], [], []>} : vector<8x128xbf16>, vector<128x512xbf16>, vector<8x512xf32> -> vector<8x512xf32>
    %45 = arith.addf %41, %44 : vector<8x512xf32>
    %46 = vector.extract_strided_slice %45 {offsets = [0, 0], sizes = [8, 128], strides = [1, 1]} : vector<8x512xf32> to vector<8x128xf32>
    %47 = arith.negf %46 : vector<8x128xf32>
    %48 = math.exp %47 : vector<8x128xf32>
    %cst_23 = arith.constant 1.000000e+00 : f32
    %49 = vector.broadcast %cst_23 : f32 to vector<8x128xf32>
    %50 = arith.addf %49, %48 : vector<8x128xf32>
    %51 = arith.divf %49, %50 : vector<8x128xf32>
    %52 = vector.extract_strided_slice %45 {offsets = [0, 128], sizes = [8, 128], strides = [1, 1]} : vector<8x512xf32> to vector<8x128xf32>
    %53 = arith.negf %52 : vector<8x128xf32>
    %54 = math.exp %53 : vector<8x128xf32>
    %cst_24 = arith.constant 1.000000e+00 : f32
    %55 = vector.broadcast %cst_24 : f32 to vector<8x128xf32>
    %56 = arith.addf %55, %54 : vector<8x128xf32>
    %57 = arith.divf %55, %56 : vector<8x128xf32>
    %58 = vector.extract_strided_slice %45 {offsets = [0, 256], sizes = [8, 128], strides = [1, 1]} : vector<8x512xf32> to vector<8x128xf32>
    %59 = math.tanh %58 : vector<8x128xf32>
    %60 = vector.extract_strided_slice %45 {offsets = [0, 384], sizes = [8, 128], strides = [1, 1]} : vector<8x512xf32> to vector<8x128xf32>
    %61 = arith.negf %60 : vector<8x128xf32>
    %62 = math.exp %61 : vector<8x128xf32>
    %cst_25 = arith.constant 1.000000e+00 : f32
    %63 = vector.broadcast %cst_25 : f32 to vector<8x128xf32>
    %64 = arith.addf %63, %62 : vector<8x128xf32>
    %65 = arith.divf %63, %64 : vector<8x128xf32>
    %66 = arith.mulf %57, %35 : vector<8x128xf32>
    %67 = arith.mulf %51, %59 : vector<8x128xf32>
    %68 = arith.addf %66, %67 : vector<8x128xf32>
    %69 = math.tanh %68 : vector<8x128xf32>
    %70 = arith.mulf %65, %69 : vector<8x128xf32>
    %c1 = arith.constant 1 : index
    %c0_26 = arith.constant 0 : index
    %c0_27 = arith.constant 0 : index
    %71 = vector.load %arg5[%c1, %c0_26, %c0_27] : memref<8x8x128xf32, #tpu.memory_space<vmem>>, vector<1x8x128xf32>
    %72 = vector.shape_cast %71 : vector<1x8x128xf32> to vector<8x128xf32>
    %73 = vector.shape_cast %70 : vector<8x128xf32> to vector<1x8x128xf32>
    tpu.vector_store %arg5[%c1, %c0_26, %c0_27], %73 {strides = array<i32>} : memref<8x8x128xf32, #tpu.memory_space<vmem>>, vector<1x8x128xf32>,
    %c16 = arith.constant 16 : index
    %c0_28 = arith.constant 0 : index
    %74 = vector.load %arg9[%c16, %c0_28] : memref<64x512xf32, #tpu.memory_space<vmem>>, vector<8x512xf32>
    %75 = arith.truncf %70 : vector<8x128xf32> to vector<8x128xbf16>
    %c0_29 = arith.constant 0 : index
    %c0_30 = arith.constant 0 : index
    %76 = vector.load %arg3[%c0_29, %c0_30] : memref<128x512xbf16, #tpu.memory_space<vmem>>, vector<128x512xbf16>
    %cst_31 = arith.constant dense<0.000000e+00> : vector<8x512xf32>
    %77 = tpu.matmul %75, %76, %cst_31 {dimension_numbers = #tpu.dot_dimension_numbers<[1], [0], [0], [1], [0, 0, 1, 1], [], []>} : vector<8x128xbf16>, vector<128x512xbf16>, vector<8x512xf32> -> vector<8x512xf32>
    %78 = arith.addf %74, %77 : vector<8x512xf32>
    %79 = vector.extract_strided_slice %78 {offsets = [0, 0], sizes = [8, 128], strides = [1, 1]} : vector<8x512xf32> to vector<8x128xf32>
    %80 = arith.negf %79 : vector<8x128xf32>
    %81 = math.exp %80 : vector<8x128xf32>
    %cst_32 = arith.constant 1.000000e+00 : f32
    %82 = vector.broadcast %cst_32 : f32 to vector<8x128xf32>
    %83 = arith.addf %82, %81 : vector<8x128xf32>
    %84 = arith.divf %82, %83 : vector<8x128xf32>
    %85 = vector.extract_strided_slice %78 {offsets = [0, 128], sizes = [8, 128], strides = [1, 1]} : vector<8x512xf32> to vector<8x128xf32>
    %86 = arith.negf %85 : vector<8x128xf32>
    %87 = math.exp %86 : vector<8x128xf32>
    %cst_33 = arith.constant 1.000000e+00 : f32
    %88 = vector.broadcast %cst_33 : f32 to vector<8x128xf32>
    %89 = arith.addf %88, %87 : vector<8x128xf32>
    %90 = arith.divf %88, %89 : vector<8x128xf32>
    %91 = vector.extract_strided_slice %78 {offsets = [0, 256], sizes = [8, 128], strides = [1, 1]} : vector<8x512xf32> to vector<8x128xf32>
    %92 = math.tanh %91 : vector<8x128xf32>
    %93 = vector.extract_strided_slice %78 {offsets = [0, 384], sizes = [8, 128], strides = [1, 1]} : vector<8x512xf32> to vector<8x128xf32>
    %94 = arith.negf %93 : vector<8x128xf32>
    %95 = math.exp %94 : vector<8x128xf32>
    %cst_34 = arith.constant 1.000000e+00 : f32
    %96 = vector.broadcast %cst_34 : f32 to vector<8x128xf32>
    %97 = arith.addf %96, %95 : vector<8x128xf32>
    %98 = arith.divf %96, %97 : vector<8x128xf32>
    %99 = arith.mulf %90, %68 : vector<8x128xf32>
    %100 = arith.mulf %84, %92 : vector<8x128xf32>
    %101 = arith.addf %99, %100 : vector<8x128xf32>
    %102 = math.tanh %101 : vector<8x128xf32>
    %103 = arith.mulf %98, %102 : vector<8x128xf32>
    %c2 = arith.constant 2 : index
    %c0_35 = arith.constant 0 : index
    %c0_36 = arith.constant 0 : index
    %104 = vector.load %arg5[%c2, %c0_35, %c0_36] : memref<8x8x128xf32, #tpu.memory_space<vmem>>, vector<1x8x128xf32>
    %105 = vector.shape_cast %104 : vector<1x8x128xf32> to vector<8x128xf32>
    %106 = vector.shape_cast %103 : vector<8x128xf32> to vector<1x8x128xf32>
    tpu.vector_store %arg5[%c2, %c0_35, %c0_36], %106 {strides = array<i32>} : memref<8x8x128xf32, #tpu.memory_space<vmem>>, vector<1x8x128xf32>,
    %c24 = arith.constant 24 : index
    %c0_37 = arith.constant 0 : index
    %107 = vector.load %arg9[%c24, %c0_37] : memref<64x512xf32, #tpu.memory_space<vmem>>, vector<8x512xf32>
    %108 = arith.truncf %103 : vector<8x128xf32> to vector<8x128xbf16>
    %c0_38 = arith.constant 0 : index
    %c0_39 = arith.constant 0 : index
    %109 = vector.load %arg3[%c0_38, %c0_39] : memref<128x512xbf16, #tpu.memory_space<vmem>>, vector<128x512xbf16>
    %cst_40 = arith.constant dense<0.000000e+00> : vector<8x512xf32>
    %110 = tpu.matmul %108, %109, %cst_40 {dimension_numbers = #tpu.dot_dimension_numbers<[1], [0], [0], [1], [0, 0, 1, 1], [], []>} : vector<8x128xbf16>, vector<128x512xbf16>, vector<8x512xf32> -> vector<8x512xf32>
    %111 = arith.addf %107, %110 : vector<8x512xf32>
    %112 = vector.extract_strided_slice %111 {offsets = [0, 0], sizes = [8, 128], strides = [1, 1]} : vector<8x512xf32> to vector<8x128xf32>
    %113 = arith.negf %112 : vector<8x128xf32>
    %114 = math.exp %113 : vector<8x128xf32>
    %cst_41 = arith.constant 1.000000e+00 : f32
    %115 = vector.broadcast %cst_41 : f32 to vector<8x128xf32>
    %116 = arith.addf %115, %114 : vector<8x128xf32>
    %117 = arith.divf %115, %116 : vector<8x128xf32>
    %118 = vector.extract_strided_slice %111 {offsets = [0, 128], sizes = [8, 128], strides = [1, 1]} : vector<8x512xf32> to vector<8x128xf32>
    %119 = arith.negf %118 : vector<8x128xf32>
    %120 = math.exp %119 : vector<8x128xf32>
    %cst_42 = arith.constant 1.000000e+00 : f32
    %121 = vector.broadcast %cst_42 : f32 to vector<8x128xf32>
    %122 = arith.addf %121, %120 : vector<8x128xf32>
    %123 = arith.divf %121, %122 : vector<8x128xf32>
    %124 = vector.extract_strided_slice %111 {offsets = [0, 256], sizes = [8, 128], strides = [1, 1]} : vector<8x512xf32> to vector<8x128xf32>
    %125 = math.tanh %124 : vector<8x128xf32>
    %126 = vector.extract_strided_slice %111 {offsets = [0, 384], sizes = [8, 128], strides = [1, 1]} : vector<8x512xf32> to vector<8x128xf32>
    %127 = arith.negf %126 : vector<8x128xf32>
    %128 = math.exp %127 : vector<8x128xf32>
    %cst_43 = arith.constant 1.000000e+00 : f32
    %129 = vector.broadcast %cst_43 : f32 to vector<8x128xf32>
    %130 = arith.addf %129, %128 : vector<8x128xf32>
    %131 = arith.divf %129, %130 : vector<8x128xf32>
    %132 = arith.mulf %123, %101 : vector<8x128xf32>
    %133 = arith.mulf %117, %125 : vector<8x128xf32>
    %134 = arith.addf %132, %133 : vector<8x128xf32>
    %135 = math.tanh %134 : vector<8x128xf32>
    %136 = arith.mulf %131, %135 : vector<8x128xf32>
    %c3 = arith.constant 3 : index
    %c0_44 = arith.constant 0 : index
    %c0_45 = arith.constant 0 : index
    %137 = vector.load %arg5[%c3, %c0_44, %c0_45] : memref<8x8x128xf32, #tpu.memory_space<vmem>>, vector<1x8x128xf32>
    %138 = vector.shape_cast %137 : vector<1x8x128xf32> to vector<8x128xf32>
    %139 = vector.shape_cast %136 : vector<8x128xf32> to vector<1x8x128xf32>
    tpu.vector_store %arg5[%c3, %c0_44, %c0_45], %139 {strides = array<i32>} : memref<8x8x128xf32, #tpu.memory_space<vmem>>, vector<1x8x128xf32>,
    %c32 = arith.constant 32 : index
    %c0_46 = arith.constant 0 : index
    %140 = vector.load %arg9[%c32, %c0_46] : memref<64x512xf32, #tpu.memory_space<vmem>>, vector<8x512xf32>
    %141 = arith.truncf %136 : vector<8x128xf32> to vector<8x128xbf16>
    %c0_47 = arith.constant 0 : index
    %c0_48 = arith.constant 0 : index
    %142 = vector.load %arg3[%c0_47, %c0_48] : memref<128x512xbf16, #tpu.memory_space<vmem>>, vector<128x512xbf16>
    %cst_49 = arith.constant dense<0.000000e+00> : vector<8x512xf32>
    %143 = tpu.matmul %141, %142, %cst_49 {dimension_numbers = #tpu.dot_dimension_numbers<[1], [0], [0], [1], [0, 0, 1, 1], [], []>} : vector<8x128xbf16>, vector<128x512xbf16>, vector<8x512xf32> -> vector<8x512xf32>
    %144 = arith.addf %140, %143 : vector<8x512xf32>
    %145 = vector.extract_strided_slice %144 {offsets = [0, 0], sizes = [8, 128], strides = [1, 1]} : vector<8x512xf32> to vector<8x128xf32>
    %146 = arith.negf %145 : vector<8x128xf32>
    %147 = math.exp %146 : vector<8x128xf32>
    %cst_50 = arith.constant 1.000000e+00 : f32
    %148 = vector.broadcast %cst_50 : f32 to vector<8x128xf32>
    %149 = arith.addf %148, %147 : vector<8x128xf32>
    %150 = arith.divf %148, %149 : vector<8x128xf32>
    %151 = vector.extract_strided_slice %144 {offsets = [0, 128], sizes = [8, 128], strides = [1, 1]} : vector<8x512xf32> to vector<8x128xf32>
    %152 = arith.negf %151 : vector<8x128xf32>
    %153 = math.exp %152 : vector<8x128xf32>
    %cst_51 = arith.constant 1.000000e+00 : f32
    %154 = vector.broadcast %cst_51 : f32 to vector<8x128xf32>
    %155 = arith.addf %154, %153 : vector<8x128xf32>
    %156 = arith.divf %154, %155 : vector<8x128xf32>
    %157 = vector.extract_strided_slice %144 {offsets = [0, 256], sizes = [8, 128], strides = [1, 1]} : vector<8x512xf32> to vector<8x128xf32>
    %158 = math.tanh %157 : vector<8x128xf32>
    %159 = vector.extract_strided_slice %144 {offsets = [0, 384], sizes = [8, 128], strides = [1, 1]} : vector<8x512xf32> to vector<8x128xf32>
    %160 = arith.negf %159 : vector<8x128xf32>
    %161 = math.exp %160 : vector<8x128xf32>
    %cst_52 = arith.constant 1.000000e+00 : f32
    %162 = vector.broadcast %cst_52 : f32 to vector<8x128xf32>
    %163 = arith.addf %162, %161 : vector<8x128xf32>
    %164 = arith.divf %162, %163 : vector<8x128xf32>
    %165 = arith.mulf %156, %134 : vector<8x128xf32>
    %166 = arith.mulf %150, %158 : vector<8x128xf32>
    %167 = arith.addf %165, %166 : vector<8x128xf32>
    %168 = math.tanh %167 : vector<8x128xf32>
    %169 = arith.mulf %164, %168 : vector<8x128xf32>
    %c4 = arith.constant 4 : index
    %c0_53 = arith.constant 0 : index
    %c0_54 = arith.constant 0 : index
    %170 = vector.load %arg5[%c4, %c0_53, %c0_54] : memref<8x8x128xf32, #tpu.memory_space<vmem>>, vector<1x8x128xf32>
    %171 = vector.shape_cast %170 : vector<1x8x128xf32> to vector<8x128xf32>
    %172 = vector.shape_cast %169 : vector<8x128xf32> to vector<1x8x128xf32>
    tpu.vector_store %arg5[%c4, %c0_53, %c0_54], %172 {strides = array<i32>} : memref<8x8x128xf32, #tpu.memory_space<vmem>>, vector<1x8x128xf32>,
    %c40 = arith.constant 40 : index
    %c0_55 = arith.constant 0 : index
    %173 = vector.load %arg9[%c40, %c0_55] : memref<64x512xf32, #tpu.memory_space<vmem>>, vector<8x512xf32>
    %174 = arith.truncf %169 : vector<8x128xf32> to vector<8x128xbf16>
    %c0_56 = arith.constant 0 : index
    %c0_57 = arith.constant 0 : index
    %175 = vector.load %arg3[%c0_56, %c0_57] : memref<128x512xbf16, #tpu.memory_space<vmem>>, vector<128x512xbf16>
    %cst_58 = arith.constant dense<0.000000e+00> : vector<8x512xf32>
    %176 = tpu.matmul %174, %175, %cst_58 {dimension_numbers = #tpu.dot_dimension_numbers<[1], [0], [0], [1], [0, 0, 1, 1], [], []>} : vector<8x128xbf16>, vector<128x512xbf16>, vector<8x512xf32> -> vector<8x512xf32>
    %177 = arith.addf %173, %176 : vector<8x512xf32>
    %178 = vector.extract_strided_slice %177 {offsets = [0, 0], sizes = [8, 128], strides = [1, 1]} : vector<8x512xf32> to vector<8x128xf32>
    %179 = arith.negf %178 : vector<8x128xf32>
    %180 = math.exp %179 : vector<8x128xf32>
    %cst_59 = arith.constant 1.000000e+00 : f32
    %181 = vector.broadcast %cst_59 : f32 to vector<8x128xf32>
    %182 = arith.addf %181, %180 : vector<8x128xf32>
    %183 = arith.divf %181, %182 : vector<8x128xf32>
    %184 = vector.extract_strided_slice %177 {offsets = [0, 128], sizes = [8, 128], strides = [1, 1]} : vector<8x512xf32> to vector<8x128xf32>
    %185 = arith.negf %184 : vector<8x128xf32>
    %186 = math.exp %185 : vector<8x128xf32>
    %cst_60 = arith.constant 1.000000e+00 : f32
    %187 = vector.broadcast %cst_60 : f32 to vector<8x128xf32>
    %188 = arith.addf %187, %186 : vector<8x128xf32>
    %189 = arith.divf %187, %188 : vector<8x128xf32>
    %190 = vector.extract_strided_slice %177 {offsets = [0, 256], sizes = [8, 128], strides = [1, 1]} : vector<8x512xf32> to vector<8x128xf32>
    %191 = math.tanh %190 : vector<8x128xf32>
    %192 = vector.extract_strided_slice %177 {offsets = [0, 384], sizes = [8, 128], strides = [1, 1]} : vector<8x512xf32> to vector<8x128xf32>
    %193 = arith.negf %192 : vector<8x128xf32>
    %194 = math.exp %193 : vector<8x128xf32>
    %cst_61 = arith.constant 1.000000e+00 : f32
    %195 = vector.broadcast %cst_61 : f32 to vector<8x128xf32>
    %196 = arith.addf %195, %194 : vector<8x128xf32>
    %197 = arith.divf %195, %196 : vector<8x128xf32>
    %198 = arith.mulf %189, %167 : vector<8x128xf32>
    %199 = arith.mulf %183, %191 : vector<8x128xf32>
    %200 = arith.addf %198, %199 : vector<8x128xf32>
    %201 = math.tanh %200 : vector<8x128xf32>
    %202 = arith.mulf %197, %201 : vector<8x128xf32>
    %c5 = arith.constant 5 : index
    %c0_62 = arith.constant 0 : index
    %c0_63 = arith.constant 0 : index
    %203 = vector.load %arg5[%c5, %c0_62, %c0_63] : memref<8x8x128xf32, #tpu.memory_space<vmem>>, vector<1x8x128xf32>
    %204 = vector.shape_cast %203 : vector<1x8x128xf32> to vector<8x128xf32>
    %205 = vector.shape_cast %202 : vector<8x128xf32> to vector<1x8x128xf32>
    tpu.vector_store %arg5[%c5, %c0_62, %c0_63], %205 {strides = array<i32>} : memref<8x8x128xf32, #tpu.memory_space<vmem>>, vector<1x8x128xf32>,
    %c48 = arith.constant 48 : index
    %c0_64 = arith.constant 0 : index
    %206 = vector.load %arg9[%c48, %c0_64] : memref<64x512xf32, #tpu.memory_space<vmem>>, vector<8x512xf32>
    %207 = arith.truncf %202 : vector<8x128xf32> to vector<8x128xbf16>
    %c0_65 = arith.constant 0 : index
    %c0_66 = arith.constant 0 : index
    %208 = vector.load %arg3[%c0_65, %c0_66] : memref<128x512xbf16, #tpu.memory_space<vmem>>, vector<128x512xbf16>
    %cst_67 = arith.constant dense<0.000000e+00> : vector<8x512xf32>
    %209 = tpu.matmul %207, %208, %cst_67 {dimension_numbers = #tpu.dot_dimension_numbers<[1], [0], [0], [1], [0, 0, 1, 1], [], []>} : vector<8x128xbf16>, vector<128x512xbf16>, vector<8x512xf32> -> vector<8x512xf32>
    %210 = arith.addf %206, %209 : vector<8x512xf32>
    %211 = vector.extract_strided_slice %210 {offsets = [0, 0], sizes = [8, 128], strides = [1, 1]} : vector<8x512xf32> to vector<8x128xf32>
    %212 = arith.negf %211 : vector<8x128xf32>
    %213 = math.exp %212 : vector<8x128xf32>
    %cst_68 = arith.constant 1.000000e+00 : f32
    %214 = vector.broadcast %cst_68 : f32 to vector<8x128xf32>
    %215 = arith.addf %214, %213 : vector<8x128xf32>
    %216 = arith.divf %214, %215 : vector<8x128xf32>
    %217 = vector.extract_strided_slice %210 {offsets = [0, 128], sizes = [8, 128], strides = [1, 1]} : vector<8x512xf32> to vector<8x128xf32>
    %218 = arith.negf %217 : vector<8x128xf32>
    %219 = math.exp %218 : vector<8x128xf32>
    %cst_69 = arith.constant 1.000000e+00 : f32
    %220 = vector.broadcast %cst_69 : f32 to vector<8x128xf32>
    %221 = arith.addf %220, %219 : vector<8x128xf32>
    %222 = arith.divf %220, %221 : vector<8x128xf32>
    %223 = vector.extract_strided_slice %210 {offsets = [0, 256], sizes = [8, 128], strides = [1, 1]} : vector<8x512xf32> to vector<8x128xf32>
    %224 = math.tanh %223 : vector<8x128xf32>
    %225 = vector.extract_strided_slice %210 {offsets = [0, 384], sizes = [8, 128], strides = [1, 1]} : vector<8x512xf32> to vector<8x128xf32>
    %226 = arith.negf %225 : vector<8x128xf32>
    %227 = math.exp %226 : vector<8x128xf32>
    %cst_70 = arith.constant 1.000000e+00 : f32
    %228 = vector.broadcast %cst_70 : f32 to vector<8x128xf32>
    %229 = arith.addf %228, %227 : vector<8x128xf32>
    %230 = arith.divf %228, %229 : vector<8x128xf32>
    %231 = arith.mulf %222, %200 : vector<8x128xf32>
    %232 = arith.mulf %216, %224 : vector<8x128xf32>
    %233 = arith.addf %231, %232 : vector<8x128xf32>
    %234 = math.tanh %233 : vector<8x128xf32>
    %235 = arith.mulf %230, %234 : vector<8x128xf32>
    %c6 = arith.constant 6 : index
    %c0_71 = arith.constant 0 : index
    %c0_72 = arith.constant 0 : index
    %236 = vector.load %arg5[%c6, %c0_71, %c0_72] : memref<8x8x128xf32, #tpu.memory_space<vmem>>, vector<1x8x128xf32>
    %237 = vector.shape_cast %236 : vector<1x8x128xf32> to vector<8x128xf32>
    %238 = vector.shape_cast %235 : vector<8x128xf32> to vector<1x8x128xf32>
    tpu.vector_store %arg5[%c6, %c0_71, %c0_72], %238 {strides = array<i32>} : memref<8x8x128xf32, #tpu.memory_space<vmem>>, vector<1x8x128xf32>,
    %c56 = arith.constant 56 : index
    %c0_73 = arith.constant 0 : index
    %239 = vector.load %arg9[%c56, %c0_73] : memref<64x512xf32, #tpu.memory_space<vmem>>, vector<8x512xf32>
    %240 = arith.truncf %235 : vector<8x128xf32> to vector<8x128xbf16>
    %c0_74 = arith.constant 0 : index
    %c0_75 = arith.constant 0 : index
    %241 = vector.load %arg3[%c0_74, %c0_75] : memref<128x512xbf16, #tpu.memory_space<vmem>>, vector<128x512xbf16>
    %cst_76 = arith.constant dense<0.000000e+00> : vector<8x512xf32>
    %242 = tpu.matmul %240, %241, %cst_76 {dimension_numbers = #tpu.dot_dimension_numbers<[1], [0], [0], [1], [0, 0, 1, 1], [], []>} : vector<8x128xbf16>, vector<128x512xbf16>, vector<8x512xf32> -> vector<8x512xf32>
    %243 = arith.addf %239, %242 : vector<8x512xf32>
    %244 = vector.extract_strided_slice %243 {offsets = [0, 0], sizes = [8, 128], strides = [1, 1]} : vector<8x512xf32> to vector<8x128xf32>
    %245 = arith.negf %244 : vector<8x128xf32>
    %246 = math.exp %245 : vector<8x128xf32>
    %cst_77 = arith.constant 1.000000e+00 : f32
    %247 = vector.broadcast %cst_77 : f32 to vector<8x128xf32>
    %248 = arith.addf %247, %246 : vector<8x128xf32>
    %249 = arith.divf %247, %248 : vector<8x128xf32>
    %250 = vector.extract_strided_slice %243 {offsets = [0, 128], sizes = [8, 128], strides = [1, 1]} : vector<8x512xf32> to vector<8x128xf32>
    %251 = arith.negf %250 : vector<8x128xf32>
    %252 = math.exp %251 : vector<8x128xf32>
    %cst_78 = arith.constant 1.000000e+00 : f32
    %253 = vector.broadcast %cst_78 : f32 to vector<8x128xf32>
    %254 = arith.addf %253, %252 : vector<8x128xf32>
    %255 = arith.divf %253, %254 : vector<8x128xf32>
    %256 = vector.extract_strided_slice %243 {offsets = [0, 256], sizes = [8, 128], strides = [1, 1]} : vector<8x512xf32> to vector<8x128xf32>
    %257 = math.tanh %256 : vector<8x128xf32>
    %258 = vector.extract_strided_slice %243 {offsets = [0, 384], sizes = [8, 128], strides = [1, 1]} : vector<8x512xf32> to vector<8x128xf32>
    %259 = arith.negf %258 : vector<8x128xf32>
    %260 = math.exp %259 : vector<8x128xf32>
    %cst_79 = arith.constant 1.000000e+00 : f32
    %261 = vector.broadcast %cst_79 : f32 to vector<8x128xf32>
    %262 = arith.addf %261, %260 : vector<8x128xf32>
    %263 = arith.divf %261, %262 : vector<8x128xf32>
    %264 = arith.mulf %255, %233 : vector<8x128xf32>
    %265 = arith.mulf %249, %257 : vector<8x128xf32>
    %266 = arith.addf %264, %265 : vector<8x128xf32>
    %267 = math.tanh %266 : vector<8x128xf32>
    %268 = arith.mulf %263, %267 : vector<8x128xf32>
    %c7 = arith.constant 7 : index
    %c0_80 = arith.constant 0 : index
    %c0_81 = arith.constant 0 : index
    %269 = vector.load %arg5[%c7, %c0_80, %c0_81] : memref<8x8x128xf32, #tpu.memory_space<vmem>>, vector<1x8x128xf32>
    %270 = vector.shape_cast %269 : vector<1x8x128xf32> to vector<8x128xf32>
    %271 = vector.shape_cast %268 : vector<8x128xf32> to vector<1x8x128xf32>
    tpu.vector_store %arg5[%c7, %c0_80, %c0_81], %271 {strides = array<i32>} : memref<8x8x128xf32, #tpu.memory_space<vmem>>, vector<1x8x128xf32>,
    %c0_82 = arith.constant 0 : index
    %c0_83 = arith.constant 0 : index
    %272 = vector.load %arg7[%c0_82, %c0_83] : memref<8x128xf32, #tpu.memory_space<vmem>>, vector<8x128xf32>
    tpu.vector_store %arg7[%c0_82, %c0_83], %268 {strides = array<i32>} : memref<8x128xf32, #tpu.memory_space<vmem>>, vector<8x128xf32>,
    %c0_84 = arith.constant 0 : index
    %c0_85 = arith.constant 0 : index
    %273 = vector.load %arg8[%c0_84, %c0_85] : memref<8x128xf32, #tpu.memory_space<vmem>>, vector<8x128xf32>
    tpu.vector_store %arg8[%c0_84, %c0_85], %266 {strides = array<i32>} : memref<8x128xf32, #tpu.memory_space<vmem>>, vector<8x128xf32>,
    %c0_86 = arith.constant 0 : index
    %c0_87 = arith.constant 0 : index
    %274 = vector.load %arg8[%c0_86, %c0_87] : memref<8x128xf32, #tpu.memory_space<vmem>>, vector<8x128xf32>
    %c0_88 = arith.constant 0 : index
    %c0_89 = arith.constant 0 : index
    %c0_90 = arith.constant 0 : index
    %275 = vector.load %arg6[%c0_88, %c0_89, %c0_90] : memref<1x8x128xf32, #tpu.memory_space<vmem>>, vector<1x8x128xf32>
    %276 = vector.shape_cast %275 : vector<1x8x128xf32> to vector<8x128xf32>
    %277 = vector.shape_cast %274 : vector<8x128xf32> to vector<1x8x128xf32>
    tpu.vector_store %arg6[%c0_88, %c0_89, %c0_90], %277 {strides = array<i32>} : memref<1x8x128xf32, #tpu.memory_space<vmem>>, vector<1x8x128xf32>,
    return
  }
  func.func @transform_0(%arg0: i32) -> (i32, i32, i32) {
    %c0_i32 = arith.constant 0 : i32
    %c0_i32_0 = arith.constant 0 : i32
    %c0_i32_1 = arith.constant 0 : i32
    return %arg0, %c0_i32, %c0_i32_0 : i32, i32, i32
  }
  func.func @transform_1(%arg0: i32) -> (i32, i32) {
    %c0_i32 = arith.constant 0 : i32
    %c0_i32_0 = arith.constant 0 : i32
    %c0_i32_1 = arith.constant 0 : i32
    return %c0_i32, %c0_i32_0 : i32, i32
  }
  func.func @transform_2(%arg0: i32) -> (i32, i32) {
    %c0_i32 = arith.constant 0 : i32
    %c0_i32_0 = arith.constant 0 : i32
    %c0_i32_1 = arith.constant 0 : i32
    return %c0_i32, %c0_i32_0 : i32, i32
  }
  func.func @transform_3(%arg0: i32) -> (i32, i32) {
    %c0_i32 = arith.constant 0 : i32
    %c0_i32_0 = arith.constant 0 : i32
    %c0_i32_1 = arith.constant 0 : i32
    return %c0_i32, %c0_i32_0 : i32, i32
  }
  func.func @transform_4(%arg0: i32) -> (i32, i32, i32) {
    %c0_i32 = arith.constant 0 : i32
    %c0_i32_0 = arith.constant 0 : i32
    %c0_i32_1 = arith.constant 0 : i32
    return %arg0, %c0_i32, %c0_i32_0 : i32, i32, i32
  }
  func.func @transform_5(%arg0: i32) -> (i32, i32, i32) {
    %c0_i32 = arith.constant 0 : i32
    %c0_i32_0 = arith.constant 0 : i32
    %c0_i32_1 = arith.constant 0 : i32
    %c0_i32_2 = arith.constant 0 : i32
    return %c0_i32, %c0_i32_0, %c0_i32_1 : i32, i32, i32
  }
}

</mosaic_0001>

<llo_original>
// kernel: tpu_custom_call.1
$region0: #{tpu_custom_call.1}
  #allocation0 [shape = 'u32[]', space=smem, size = 0x4, offset = 0x4, fixed_abs, tag = 'smem constant byte address 0x4 - core index']
  #allocation1 [shape = 'u32[144,128]{1,0:T(1,128)}', space=vmem, size = 0x12000, scoped, tag = 'internal scratch']
  #allocation2 [shape = 'f32[8,128]{1,0:T(8,128)}', space=vmem, size = 0x1000, scoped, tag = 'scratch operand']
  #allocation3 [shape = 'f32[8,128]{1,0:T(8,128)}', space=vmem, size = 0x1000, scoped, tag = 'scratch operand']
  #allocation4 [shape = 'f32[64,512]{1,0:T(8,128)}', space=vmem, size = 0x20000, scoped, tag = 'scratch operand']
  %s0 = inlined_call_operand.hbm [shape: bf16[8,8,16], index: 0, kind: input, shape index: {}]
  %s1 = inlined_call_operand.hbm [shape: bf16[16,512], index: 1, kind: input, shape index: {}]
  %s2 = inlined_call_operand.hbm [shape: bf16[128,512], index: 2, kind: input, shape index: {}]
  %s3 = inlined_call_operand.vmem [shape: f32[1,512], index: 3, kind: input, shape index: {}]
  %s4 = inlined_call_operand.hbm [shape: f32[8,8,128], index: 4, kind: output, shape index: {0}]
  %s5 = inlined_call_operand.hbm [shape: f32[1,8,128], index: 5, kind: output, shape index: {1}]
  %6 = xla_tuple %s4, %s5
  %s7 = sld [smem:[#allocation0]]
  $region50: #{tpu_custom_call.1} parent=0
    _
  %s9 = ssub.s32 1, %s7
  %s10 = scalar_select 0, %s9, %s7
  $region1: #{tpu_custom_call.1} parent=0
    #allocation5 [shape = 'u8[16384]{0}', space=vmem, size = 0x4000, scoped, tag = 'input window, operand 0, single buffered']
    #allocation6 [shape = 's32[1]{0}', space=sflag, size = 0x4, scoped, tag = 'scoped memory for tpu_custom_call.1']
    #allocation7 [shape = 's32[1]{0}', space=sflag, size = 0x4, scoped, tag = 'scoped memory for tpu_custom_call.1']
    #allocation8 [shape = 'u8[16384]{0}', space=vmem, size = 0x4000, scoped, tag = 'input window, operand 1, single buffered']
    #allocation9 [shape = 's32[1]{0}', space=sflag, size = 0x4, scoped, tag = 'scoped memory for tpu_custom_call.1']
    #allocation10 [shape = 'u8[131072]{0}', space=vmem, size = 0x20000, scoped, tag = 'input window, operand 2, single buffered']
    #allocation11 [shape = 'u8[32768]{0}', space=vmem, size = 0x8000, scoped, tag = 'output window, operand 0, single buffered']
    #allocation12 [shape = 'u8[4096]{0}', space=vmem, size = 0x1000, scoped, tag = 'output window, operand 1, single buffered']
    #allocation13 [shape = 's32[1]{0}', space=sflag, size = 0x4, scoped, tag = 'scoped memory for tpu_custom_call.1']
    %11 = vsyncpa [#allocation6], 0
    %12 = vsyncpa [#allocation9], 0
    %13 = vsyncpa [#allocation7], 0
    %14 = vsyncpa [#allocation13], 0
    // Predicated region
    $region2: #{tpu_custom_call.1} parent=1 // pred_check
      _
    $region3: #{tpu_custom_call.1} parent=1 // pred_check_branch
      %16 = sbr.rel (0) target = $region5
    $region4: #{tpu_custom_call.1} parent=1 // pred_region
      %s18 = ssub.s32 512, 512
      %19 = vsyncadd [#allocation6], %s18
      %s20 = sshll.u32 [#allocation5], 4
      %s21 = int_to_ptr.vmem [resolvable:$true] %s20
      %26 = dma.hbm_to_vmem [thread:$0]  %s0, 512, %s21, [#allocation6], 64, 64, 4
    $region5: #{tpu_custom_call.1} parent=1 // pred_fallthru
      _
    // Predicated region
    $region6: #{tpu_custom_call.1} parent=1 // pred_check
      _
    $region7: #{tpu_custom_call.1} parent=1 // pred_check_branch
      %28 = sbr.rel (0) target = $region9
    $region8: #{tpu_custom_call.1} parent=1 // pred_region
      %s30 = ssub.s32 512, 512
      %31 = vsyncadd [#allocation9], %s30
      %s32 = sshll.u32 [#allocation8], 4
      %s33 = int_to_ptr.vmem [resolvable:$true] %s32
      %38 = dma.hbm_to_vmem [thread:$0]  %s1, 512, %s33, [#allocation9], 256, 256, 16
    $region9: #{tpu_custom_call.1} parent=1 // pred_fallthru
      _
    // Predicated region
    $region10: #{tpu_custom_call.1} parent=1 // pred_check
      _
    $region11: #{tpu_custom_call.1} parent=1 // pred_check_branch
      %40 = sbr.rel (0) target = $region13
    $region12: #{tpu_custom_call.1} parent=1 // pred_region
      %s42 = ssub.s32 4096, 4096
      %43 = vsyncadd [#allocation9], %s42
      %s44 = sshll.u32 [#allocation10], 4
      %s45 = int_to_ptr.vmem [resolvable:$true] %s44
      %50 = dma.hbm_to_vmem [thread:$0]  %s2, 4096, %s45, [#allocation9], 256, 256, 16
    $region13: #{tpu_custom_call.1} parent=1 // pred_fallthru
      _
    // Predicated region
    $region14: #{tpu_custom_call.1} parent=1 // pred_check
      _
    $region15: #{tpu_custom_call.1} parent=1 // pred_check_branch
      %52 = sbr.rel (0) target = $region17
    $region16: #{tpu_custom_call.1} parent=1 // pred_region
      _
    $region17: #{tpu_custom_call.1} parent=1 // pred_fallthru
      _
    // Predicated region
    $region18: #{tpu_custom_call.1} parent=1 // pred_check
      _
    $region19: #{tpu_custom_call.1} parent=1 // pred_check_branch
      %54 = sbr.rel (0) target = $region21
    $region20: #{tpu_custom_call.1} parent=1 // pred_region
      %55 = dma.done [#allocation6], 512
    $region21: #{tpu_custom_call.1} parent=1 // pred_fallthru
      _
    // Predicated region
    $region22: #{tpu_custom_call.1} parent=1 // pred_check
      _
    $region23: #{tpu_custom_call.1} parent=1 // pred_check_branch
      %57 = sbr.rel (0) target = $region25
    $region24: #{tpu_custom_call.1} parent=1 // pred_region
      %58 = dma.done [#allocation9], 512
    $region25: #{tpu_custom_call.1} parent=1 // pred_fallthru
      _
    // Predicated region
    $region26: #{tpu_custom_call.1} parent=1 // pred_check
      _
    $region27: #{tpu_custom_call.1} parent=1 // pred_check_branch
      %60 = sbr.rel (0) target = $region29
    $region28: #{tpu_custom_call.1} parent=1 // pred_region
      %61 = dma.done [#allocation9], 4096
    $region29: #{tpu_custom_call.1} parent=1 // pred_fallthru
      _
    %p63 = scmp.eq.s32.totalorder 0, 0
    // Predicated region
    $region30: #{tpu_custom_call.1} parent=1 // pred_check
      %p64 = pneg %p63
    $region31: #{tpu_custom_call.1} parent=1 // pred_check_branch
      %66 = sbr.rel (%p64) target = $region33
    $region32: #{tpu_custom_call.1} parent=1 // pred_region
      %67 = vst [vmem:[#allocation2] sm:$0xff] 0.0
      %68 = vst [vmem:[#allocation3] sm:$0xff] 0.0
    $region33: #{tpu_custom_call.1} parent=1 // pred_fallthru
      _
    %v69 = vld [vmem:[#allocation5] sm:$0xf]
    %v70 = vld [vmem:[#allocation5 + $0x4] sm:$0xf]
    %v71 = vld [vmem:[#allocation5 + $0x8] sm:$0xf]
    %v72 = vld [vmem:[#allocation5 + $0xc] sm:$0xf]
    %v73 = vld [vmem:[#allocation5 + $0x10] sm:$0xf]
    %v74 = vld [vmem:[#allocation5 + $0x14] sm:$0xf]
    %v75 = vld [vmem:[#allocation5 + $0x18] sm:$0xf]
    %v76 = vld [vmem:[#allocation5 + $0x1c] sm:$0xf]
    %v77 = vld [vmem:[#allocation8] sm:$0xff]
    %v78 = vld [vmem:[#allocation8 + $0x8] sm:$0xff]
    %v79 = vld [vmem:[#allocation8 + $0x10] sm:$0xff]
    %v80 = vld [vmem:[#allocation8 + $0x18] sm:$0xff]
    %v81 = vld [vmem:[%s3] sm:$0xf]
    %v83 = vlaneseq
    %v84 = vshrl.u32 %v83, 7
    %v85 = vsub.s32 0, %v84
    %v86 = vrot.slane %v81, %v85
    %v87 = vlaneseq
    %v88 = vshrl.u32 %v87, 7
    %v89 = vsub.s32 1, %v88
    %v90 = vrot.slane %v81, %v89
    %v91 = vlaneseq
    %v92 = vshrl.u32 %v91, 7
    %v93 = vsub.s32 2, %v92
    %v94 = vrot.slane %v81, %v93
    %v95 = vlaneseq
    %v96 = vshrl.u32 %v95, 7
    %v97 = vsub.s32 3, %v96
    %v98 = vrot.slane %v81, %v97
    %v111 = vunpack.c.l.b16 %v69
    %v112 = vunpack.c.l.b16 %v70
    %v113 = vunpack.c.l.b16 %v71
    %v114 = vunpack.c.l.b16 %v72
    %v115 = vunpack.c.l.b16 %v73
    %v116 = vunpack.c.l.b16 %v74
    %v117 = vunpack.c.l.b16 %v75
    %v118 = vunpack.c.l.b16 %v76
    %v119 = vpack.c.b16 %v112, %v111
    %v120 = vpack.c.b16 %v114, %v113
    %v121 = vpack.c.b16 %v116, %v115
    %v122 = vpack.c.b16 %v118, %v117
    %v127 = vunpack.c.l.b16 %v77
    %v128 = vunpack.c.h.b16 %v77
    %v129 = vunpack.c.l.b16 %v78
    %v130 = vunpack.c.h.b16 %v78
    %v131 = vunpack.c.l.b16 %v79
    %v132 = vunpack.c.h.b16 %v79
    %v133 = vunpack.c.l.b16 %v80
    %v134 = vunpack.c.h.b16 %v80
    %v135 = vpack.c.b16 %v131, %v127
    %v136 = vpack.c.b16 %v132, %v128
    %v137 = vpack.c.b16 %v133, %v129
    %v138 = vpack.c.b16 %v134, %v130
    %vm143 = vcmask 130048
    %v145 = vsel %vm143, %v119, 0
    %v148 = vsel %vm143, %v120, 0
    %v151 = vsel %vm143, %v121, 0
    %v154 = vsel %vm143, %v122, 0
    %156 = vmatprep.subr.bf16.mxu0 %v136
    %157 = vmatpush1.bf16.msra.mxu0 %v135
    %158 = vmatprep.subr.bf16.mxu0 0
    %159 = vmatpush1.bf16.msra.mxu0 0
    %160 = vmatprep.subr.bf16.mxu0 0
    %161 = vmatpush1.bf16.msra.mxu0 0
    %162 = vmatprep.subr.bf16.mxu0 0
    %163 = vmatpush1.bf16.msra.mxu0 0
    %164 = vmatprep.subr.bf16.mxu0 0
    %165 = vmatpush1.bf16.msra.mxu0 0
    %166 = vmatprep.subr.bf16.mxu0 0
    %167 = vmatpush1.bf16.msra.mxu0 0
    %168 = vmatprep.subr.bf16.mxu0 0
    %169 = vmatpush1.bf16.msra.mxu0 0
    %170 = vmatprep.subr.bf16.mxu0 0
    %171 = vmatpush1.bf16.msra.mxu0 0
    %172 = vmatprep.subr.bf16.mxu0 0
    %173 = vmatpush1.bf16.msra.mxu0 0
    %174 = vmatprep.subr.bf16.mxu0 0
    %175 = vmatpush1.bf16.msra.mxu0 0
    %176 = vmatprep.subr.bf16.mxu0 0
    %177 = vmatpush1.bf16.msra.mxu0 0
    %178 = vmatprep.subr.bf16.mxu0 0
    %179 = vmatpush1.bf16.msra.mxu0 0
    %180 = vmatprep.subr.bf16.mxu0 0
    %181 = vmatpush1.bf16.msra.mxu0 0
    %182 = vmatprep.subr.bf16.mxu0 0
    %183 = vmatpush1.bf16.msra.mxu0 0
    %184 = vmatprep.subr.bf16.mxu0 0
    %185 = vmatpush1.bf16.msra.mxu0 0
    %186 = vmatprep.subr.bf16.mxu0 0
    %187 = vmatpush1.bf16.msra.mxu0 0
    %188 = vmatprep.mubr.bf16.mxu0 0
    %189 = vmatmul.mubr.bf16.gmra.mrb[0].mxu0 %v145
    %v190 = vpop.f32.mrb[0].mxu0
    %v191 = vadd.f32 %v86, %v190
    %v192 = vpop.f32.mrb[0].mxu0
    %v193 = vadd.f32 %v90, %v192
    %v194 = vpop.f32.mrb[0].mxu0
    %v195 = vadd.f32 %v86, %v194
    %v196 = vpop.f32.mrb[0].mxu0
    %v197 = vadd.f32 %v90, %v196
    %198 = vmatprep.mubr.bf16.mxu0 0
    %199 = vmatmul.mubr.bf16.gmra.mrb[0].mxu0 %v148
    %v200 = vpop.f32.mrb[0].mxu0
    %v201 = vadd.f32 %v86, %v200
    %v202 = vpop.f32.mrb[0].mxu0
    %v203 = vadd.f32 %v90, %v202
    %v204 = vpop.f32.mrb[0].mxu0
    %v205 = vadd.f32 %v86, %v204
    %v206 = vpop.f32.mrb[0].mxu0
    %v207 = vadd.f32 %v90, %v206
    %208 = vmatprep.mubr.bf16.mxu0 0
    %209 = vmatmul.mubr.bf16.gmra.mrb[0].mxu0 %v151
    %v210 = vpop.f32.mrb[0].mxu0
    %v211 = vadd.f32 %v86, %v210
    %v212 = vpop.f32.mrb[0].mxu0
    %v213 = vadd.f32 %v90, %v212
    %v214 = vpop.f32.mrb[0].mxu0
    %v215 = vadd.f32 %v86, %v214
    %v216 = vpop.f32.mrb[0].mxu0
    %v217 = vadd.f32 %v90, %v216
    %218 = vmatprep.mubr.bf16.mxu0 0
    %219 = vmatmul.mubr.bf16.gmra.mrb[0].mxu0 %v154
    %v220 = vpop.f32.mrb[0].mxu0
    %v221 = vadd.f32 %v86, %v220
    %v222 = vpop.f32.mrb[0].mxu0
    %v223 = vadd.f32 %v90, %v222
    %v224 = vpop.f32.mrb[0].mxu0
    %v225 = vadd.f32 %v86, %v224
    %v226 = vpop.f32.mrb[0].mxu0
    %v227 = vadd.f32 %v90, %v226
    %228 = vdwg.mxu0
    %229 = vmatprep.subr.bf16.mxu0 %v138
    %230 = vmatpush1.bf16.msra.mxu0 %v137
    %231 = vmatprep.subr.bf16.mxu0 0
    %232 = vmatpush1.bf16.msra.mxu0 0
    %233 = vmatprep.subr.bf16.mxu0 0
    %234 = vmatpush1.bf16.msra.mxu0 0
    %235 = vmatprep.subr.bf16.mxu0 0
    %236 = vmatpush1.bf16.msra.mxu0 0
    %237 = vmatprep.subr.bf16.mxu0 0
    %238 = vmatpush1.bf16.msra.mxu0 0
    %239 = vmatprep.subr.bf16.mxu0 0
    %240 = vmatpush1.bf16.msra.mxu0 0
    %241 = vmatprep.subr.bf16.mxu0 0
    %242 = vmatpush1.bf16.msra.mxu0 0
    %243 = vmatprep.subr.bf16.mxu0 0
    %244 = vmatpush1.bf16.msra.mxu0 0
    %245 = vmatprep.subr.bf16.mxu0 0
    %246 = vmatpush1.bf16.msra.mxu0 0
    %247 = vmatprep.subr.bf16.mxu0 0
    %248 = vmatpush1.bf16.msra.mxu0 0
    %249 = vmatprep.subr.bf16.mxu0 0
    %250 = vmatpush1.bf16.msra.mxu0 0
    %251 = vmatprep.subr.bf16.mxu0 0
    %252 = vmatpush1.bf16.msra.mxu0 0
    %253 = vmatprep.subr.bf16.mxu0 0
    %254 = vmatpush1.bf16.msra.mxu0 0
    %255 = vmatprep.subr.bf16.mxu0 0
    %256 = vmatpush1.bf16.msra.mxu0 0
    %257 = vmatprep.subr.bf16.mxu0 0
    %258 = vmatpush1.bf16.msra.mxu0 0
    %259 = vmatprep.subr.bf16.mxu0 0
    %260 = vmatpush1.bf16.msra.mxu0 0
    %261 = vmatprep.mubr.bf16.mxu0 0
    %262 = vmatmul.mubr.bf16.gmra.mrb[0].mxu0 %v145
    %v263 = vpop.f32.mrb[0].mxu0
    %v264 = vadd.f32 %v94, %v263
    %v265 = vpop.f32.mrb[0].mxu0
    %v266 = vadd.f32 %v98, %v265
    %v267 = vpop.f32.mrb[0].mxu0
    %v268 = vadd.f32 %v94, %v267
    %v269 = vpop.f32.mrb[0].mxu0
    %v270 = vadd.f32 %v98, %v269
    %271 = vmatprep.mubr.bf16.mxu0 0
    %272 = vmatmul.mubr.bf16.gmra.mrb[0].mxu0 %v148
    %v273 = vpop.f32.mrb[0].mxu0
    %v274 = vadd.f32 %v94, %v273
    %v275 = vpop.f32.mrb[0].mxu0
    %v276 = vadd.f32 %v98, %v275
    %v277 = vpop.f32.mrb[0].mxu0
    %v278 = vadd.f32 %v94, %v277
    %v279 = vpop.f32.mrb[0].mxu0
    %v280 = vadd.f32 %v98, %v279
    %281 = vmatprep.mubr.bf16.mxu0 0
    %282 = vmatmul.mubr.bf16.gmra.mrb[0].mxu0 %v151
    %v283 = vpop.f32.mrb[0].mxu0
    %v284 = vadd.f32 %v94, %v283
    %v285 = vpop.f32.mrb[0].mxu0
    %v286 = vadd.f32 %v98, %v285
    %v287 = vpop.f32.mrb[0].mxu0
    %v288 = vadd.f32 %v94, %v287
    %v289 = vpop.f32.mrb[0].mxu0
    %v290 = vadd.f32 %v98, %v289
    %291 = vmatprep.mubr.bf16.mxu0 0
    %292 = vmatmul.mubr.bf16.gmra.mrb[0].mxu0 %v154
    %v293 = vpop.f32.mrb[0].mxu0
    %v294 = vadd.f32 %v94, %v293
    %v295 = vpop.f32.mrb[0].mxu0
    %v296 = vadd.f32 %v98, %v295
    %v297 = vpop.f32.mrb[0].mxu0
    %v298 = vadd.f32 %v94, %v297
    %v299 = vpop.f32.mrb[0].mxu0
    %v300 = vadd.f32 %v98, %v299
    %301 = vdwg.mxu0
    %302 = vst [vmem:[#allocation4] sm:$0xff] %v191
    %303 = vst [vmem:[#allocation4 + $0x8] sm:$0xff] %v193
    %304 = vst [vmem:[#allocation4 + $0x10] sm:$0xff] %v264
    %305 = vst [vmem:[#allocation4 + $0x18] sm:$0xff] %v266
    %306 = vst [vmem:[#allocation4 + $0x20] sm:$0xff] %v195
    %307 = vst [vmem:[#allocation4 + $0x28] sm:$0xff] %v197
    %308 = vst [vmem:[#allocation4 + $0x30] sm:$0xff] %v268
    %309 = vst [vmem:[#allocation4 + $0x38] sm:$0xff] %v270
    %310 = vst [vmem:[#allocation4 + $0x40] sm:$0xff] %v201
    %311 = vst [vmem:[#allocation4 + $0x48] sm:$0xff] %v203
    %312 = vst [vmem:[#allocation4 + $0x50] sm:$0xff] %v274
    %313 = vst [vmem:[#allocation4 + $0x58] sm:$0xff] %v276
    %314 = vst [vmem:[#allocation4 + $0x60] sm:$0xff] %v205
    %315 = vst [vmem:[#allocation4 + $0x68] sm:$0xff] %v207
    %316 = vst [vmem:[#allocation4 + $0x70] sm:$0xff] %v278
    %317 = vst [vmem:[#allocation4 + $0x78] sm:$0xff] %v280
    %318 = vst [vmem:[#allocation4 + $0x80] sm:$0xff] %v211
    %319 = vst [vmem:[#allocation4 + $0x88] sm:$0xff] %v213
    %320 = vst [vmem:[#allocation4 + $0x90] sm:$0xff] %v284
    %321 = vst [vmem:[#allocation4 + $0x98] sm:$0xff] %v286
    %322 = vst [vmem:[#allocation4 + $0xa0] sm:$0xff] %v215
    %323 = vst [vmem:[#allocation4 + $0xa8] sm:$0xff] %v217
    %324 = vst [vmem:[#allocation4 + $0xb0] sm:$0xff] %v288
    %325 = vst [vmem:[#allocation4 + $0xb8] sm:$0xff] %v290
    %326 = vst [vmem:[#allocation4 + $0xc0] sm:$0xff] %v221
    %327 = vst [vmem:[#allocation4 + $0xc8] sm:$0xff] %v223
    %328 = vst [vmem:[#allocation4 + $0xd0] sm:$0xff] %v294
    %329 = vst [vmem:[#allocation4 + $0xd8] sm:$0xff] %v296
    %330 = vst [vmem:[#allocation4 + $0xe0] sm:$0xff] %v225
    %331 = vst [vmem:[#allocation4 + $0xe8] sm:$0xff] %v227
    %332 = vst [vmem:[#allocation4 + $0xf0] sm:$0xff] %v298
    %333 = vst [vmem:[#allocation4 + $0xf8] sm:$0xff] %v300
    %v334 = vld [vmem:[#allocation3] sm:$0xff]
    %v335 = vld [vmem:[#allocation4] sm:$0xff]
    %v336 = vld [vmem:[#allocation4 + $0x8] sm:$0xff]
    %v337 = vld [vmem:[#allocation4 + $0x10] sm:$0xff]
    %v338 = vld [vmem:[#allocation4 + $0x18] sm:$0xff]
    %v339 = vxor.u32 %v335, 2147483648
    %v340 = vmul.f32 %v339, 1.442695
    %v341 = vpow.pop %v340
    %v342 = vadd.f32 %v341, 1.0
    %v343 = vrcp.pop %v342
    %v344 = vmul.f32 1.0, %v343
    %v345 = vxor.u32 %v336, 2147483648
    %v346 = vmul.f32 %v345, 1.442695
    %v347 = vpow.pop %v346
    %v348 = vadd.f32 %v347, 1.0
    %v349 = vrcp.pop %v348
    %v350 = vmul.f32 1.0, %v349
    %v351 = vtanh.pop %v337
    %v352 = vxor.u32 %v338, 2147483648
    %v353 = vmul.f32 %v352, 1.442695
    %v354 = vpow.pop %v353
    %v355 = vadd.f32 %v354, 1.0
    %v356 = vrcp.pop %v355
    %v357 = vmul.f32 1.0, %v356
    %v358 = vmul.f32 %v350, %v334
    %v359 = vmul.f32 %v344, %v351
    %v360 = vadd.f32 %v358, %v359
    %v361 = vtanh.pop %v360
    %v362 = vmul.f32 %v357, %v361
    %363 = vst [vmem:[#allocation11] sm:$0xff] %v362
    %v364 = vld [vmem:[#allocation4 + $0x20] sm:$0xff]
    %v365 = vld [vmem:[#allocation4 + $0x28] sm:$0xff]
    %v366 = vld [vmem:[#allocation4 + $0x30] sm:$0xff]
    %v367 = vld [vmem:[#allocation4 + $0x38] sm:$0xff]
    %v368 = vpack.c.bf16 %v362, %v362
    %v369 = vld [vmem:[#allocation10] sm:$0xff]
    %v370 = vld [vmem:[#allocation10 + $0x8] sm:$0xff]
    %v371 = vld [vmem:[#allocation10 + $0x10] sm:$0xff]
    %v372 = vld [vmem:[#allocation10 + $0x18] sm:$0xff]
    %v373 = vld [vmem:[#allocation10 + $0x20] sm:$0xff]
    %v374 = vld [vmem:[#allocation10 + $0x28] sm:$0xff]
    %v375 = vld [vmem:[#allocation10 + $0x30] sm:$0xff]
    %v376 = vld [vmem:[#allocation10 + $0x38] sm:$0xff]
    %v377 = vld [vmem:[#allocation10 + $0x40] sm:$0xff]
    %v378 = vld [vmem:[#allocation10 + $0x48] sm:$0xff]
    %v379 = vld [vmem:[#allocation10 + $0x50] sm:$0xff]
    %v380 = vld [vmem:[#allocation10 + $0x58] sm:$0xff]
    %v381 = vld [vmem:[#allocation10 + $0x60] sm:$0xff]
    %v382 = vld [vmem:[#allocation10 + $0x68] sm:$0xff]
    %v383 = vld [vmem:[#allocation10 + $0x70] sm:$0xff]
    %v384 = vld [vmem:[#allocation10 + $0x78] sm:$0xff]
    %v385 = vld [vmem:[#allocation10 + $0x80] sm:$0xff]
    %v386 = vld [vmem:[#allocation10 + $0x88] sm:$0xff]
    %v387 = vld [vmem:[#allocation10 + $0x90] sm:$0xff]
    %v388 = vld [vmem:[#allocation10 + $0x98] sm:$0xff]
    %v389 = vld [vmem:[#allocation10 + $0xa0] sm:$0xff]
    %v390 = vld [vmem:[#allocation10 + $0xa8] sm:$0xff]
    %v391 = vld [vmem:[#allocation10 + $0xb0] sm:$0xff]
    %v392 = vld [vmem:[#allocation10 + $0xb8] sm:$0xff]
    %v393 = vld [vmem:[#allocation10 + $0xc0] sm:$0xff]
    %v394 = vld [vmem:[#allocation10 + $0xc8] sm:$0xff]
    %v395 = vld [vmem:[#allocation10 + $0xd0] sm:$0xff]
    %v396 = vld [vmem:[#allocation10 + $0xd8] sm:$0xff]
    %v397 = vld [vmem:[#allocation10 + $0xe0] sm:$0xff]
    %v398 = vld [vmem:[#allocation10 + $0xe8] sm:$0xff]
    %v399 = vld [vmem:[#allocation10 + $0xf0] sm:$0xff]
    %v400 = vld [vmem:[#allocation10 + $0xf8] sm:$0xff]
    %v433 = vunpack.c.l.b16 %v369
    %v434 = vunpack.c.h.b16 %v369
    %v435 = vunpack.c.l.b16 %v370
    %v436 = vunpack.c.h.b16 %v370
    %v437 = vunpack.c.l.b16 %v371
    %v438 = vunpack.c.h.b16 %v371
    %v439 = vunpack.c.l.b16 %v372
    %v440 = vunpack.c.h.b16 %v372
    %v441 = vunpack.c.l.b16 %v373
    %v442 = vunpack.c.h.b16 %v373
    %v443 = vunpack.c.l.b16 %v374
    %v444 = vunpack.c.h.b16 %v374
    %v445 = vunpack.c.l.b16 %v375
    %v446 = vunpack.c.h.b16 %v375
    %v447 = vunpack.c.l.b16 %v376
    %v448 = vunpack.c.h.b16 %v376
    %v449 = vunpack.c.l.b16 %v377
    %v450 = vunpack.c.h.b16 %v377
    %v451 = vunpack.c.l.b16 %v378
    %v452 = vunpack.c.h.b16 %v378
    %v453 = vunpack.c.l.b16 %v379
    %v454 = vunpack.c.h.b16 %v379
    %v455 = vunpack.c.l.b16 %v380
    %v456 = vunpack.c.h.b16 %v380
    %v457 = vunpack.c.l.b16 %v381
    %v458 = vunpack.c.h.b16 %v381
    %v459 = vunpack.c.l.b16 %v382
    %v460 = vunpack.c.h.b16 %v382
    %v461 = vunpack.c.l.b16 %v383
    %v462 = vunpack.c.h.b16 %v383
    %v463 = vunpack.c.l.b16 %v384
    %v464 = vunpack.c.h.b16 %v384
    %v465 = vunpack.c.l.b16 %v385
    %v466 = vunpack.c.h.b16 %v385
    %v467 = vunpack.c.l.b16 %v386
    %v468 = vunpack.c.h.b16 %v386
    %v469 = vunpack.c.l.b16 %v387
    %v470 = vunpack.c.h.b16 %v387
    %v471 = vunpack.c.l.b16 %v388
    %v472 = vunpack.c.h.b16 %v388
    %v473 = vunpack.c.l.b16 %v389
    %v474 = vunpack.c.h.b16 %v389
    %v475 = vunpack.c.l.b16 %v390
    %v476 = vunpack.c.h.b16 %v390
    %v477 = vunpack.c.l.b16 %v391
    %v478 = vunpack.c.h.b16 %v391
    %v479 = vunpack.c.l.b16 %v392
    %v480 = vunpack.c.h.b16 %v392
    %v481 = vunpack.c.l.b16 %v393
    %v482 = vunpack.c.h.b16 %v393
    %v483 = vunpack.c.l.b16 %v394
    %v484 = vunpack.c.h.b16 %v394
    %v485 = vunpack.c.l.b16 %v395
    %v486 = vunpack.c.h.b16 %v395
    %v487 = vunpack.c.l.b16 %v396
    %v488 = vunpack.c.h.b16 %v396
    %v489 = vunpack.c.l.b16 %v397
    %v490 = vunpack.c.h.b16 %v397
    %v491 = vunpack.c.l.b16 %v398
    %v492 = vunpack.c.h.b16 %v398
    %v493 = vunpack.c.l.b16 %v399
    %v494 = vunpack.c.h.b16 %v399
    %v495 = vunpack.c.l.b16 %v400
    %v496 = vunpack.c.h.b16 %v400
    %v497 = vpack.c.b16 %v437, %v433
    %v498 = vpack.c.b16 %v438, %v434
    %v499 = vpack.c.b16 %v439, %v435
    %v500 = vpack.c.b16 %v440, %v436
    %v501 = vpack.c.b16 %v445, %v441
    %v502 = vpack.c.b16 %v446, %v442
    %v503 = vpack.c.b16 %v447, %v443
    %v504 = vpack.c.b16 %v448, %v444
    %v505 = vpack.c.b16 %v453, %v449
    %v506 = vpack.c.b16 %v454, %v450
    %v507 = vpack.c.b16 %v455, %v451
    %v508 = vpack.c.b16 %v456, %v452
    %v509 = vpack.c.b16 %v461, %v457
    %v510 = vpack.c.b16 %v462, %v458
    %v511 = vpack.c.b16 %v463, %v459
    %v512 = vpack.c.b16 %v464, %v460
    %v513 = vpack.c.b16 %v469, %v465
    %v514 = vpack.c.b16 %v470, %v466
    %v515 = vpack.c.b16 %v471, %v467
    %v516 = vpack.c.b16 %v472, %v468
    %v517 = vpack.c.b16 %v477, %v473
    %v518 = vpack.c.b16 %v478, %v474
    %v519 = vpack.c.b16 %v479, %v475
    %v520 = vpack.c.b16 %v480, %v476
    %v521 = vpack.c.b16 %v485, %v481
    %v522 = vpack.c.b16 %v486, %v482
    %v523 = vpack.c.b16 %v487, %v483
    %v524 = vpack.c.b16 %v488, %v484
    %v525 = vpack.c.b16 %v493, %v489
    %v526 = vpack.c.b16 %v494, %v490
    %v527 = vpack.c.b16 %v495, %v491
    %v528 = vpack.c.b16 %v496, %v492
    %561 = vmatprep.subr.bf16.mxu0 %v498
    %562 = vmatpush1.bf16.msra.mxu0 %v497
    %563 = vmatprep.subr.bf16.mxu0 %v502
    %564 = vmatpush1.bf16.msra.mxu0 %v501
    %565 = vmatprep.subr.bf16.mxu0 %v506
    %566 = vmatpush1.bf16.msra.mxu0 %v505
    %567 = vmatprep.subr.bf16.mxu0 %v510
    %568 = vmatpush1.bf16.msra.mxu0 %v509
    %569 = vmatprep.subr.bf16.mxu0 %v514
    %570 = vmatpush1.bf16.msra.mxu0 %v513
    %571 = vmatprep.subr.bf16.mxu0 %v518
    %572 = vmatpush1.bf16.msra.mxu0 %v517
    %573 = vmatprep.subr.bf16.mxu0 %v522
    %574 = vmatpush1.bf16.msra.mxu0 %v521
    %575 = vmatprep.subr.bf16.mxu0 %v526
    %576 = vmatpush1.bf16.msra.mxu0 %v525
    %577 = vmatprep.subr.bf16.mxu0 0
    %578 = vmatpush1.bf16.msra.mxu0 0
    %579 = vmatprep.subr.bf16.mxu0 0
    %580 = vmatpush1.bf16.msra.mxu0 0
    %581 = vmatprep.subr.bf16.mxu0 0
    %582 = vmatpush1.bf16.msra.mxu0 0
    %583 = vmatprep.subr.bf16.mxu0 0
    %584 = vmatpush1.bf16.msra.mxu0 0
    %585 = vmatprep.subr.bf16.mxu0 0
    %586 = vmatpush1.bf16.msra.mxu0 0
    %587 = vmatprep.subr.bf16.mxu0 0
    %588 = vmatpush1.bf16.msra.mxu0 0
    %589 = vmatprep.subr.bf16.mxu0 0
    %590 = vmatpush1.bf16.msra.mxu0 0
    %591 = vmatprep.subr.bf16.mxu0 0
    %592 = vmatpush1.bf16.msra.mxu0 0
    %593 = vmatprep.mubr.bf16.mxu0 0
    %594 = vmatmul.mubr.bf16.gmra.mrb[0].mxu0 %v368
    %v595 = vpop.f32.mrb[0].mxu0
    %v596 = vadd.f32 0.0, %v595
    %v597 = vpop.f32.mrb[0].mxu0
    %v598 = vadd.f32 0.0, %v597
    %v599 = vpop.f32.mrb[0].mxu0
    %v600 = vpop.f32.mrb[0].mxu0
    %601 = vdwg.mxu0
    %602 = vmatprep.subr.bf16.mxu0 %v500
    %603 = vmatpush1.bf16.msra.mxu0 %v499
    %604 = vmatprep.subr.bf16.mxu0 %v504
    %605 = vmatpush1.bf16.msra.mxu0 %v503
    %606 = vmatprep.subr.bf16.mxu0 %v508
    %607 = vmatpush1.bf16.msra.mxu0 %v507
    %608 = vmatprep.subr.bf16.mxu0 %v512
    %609 = vmatpush1.bf16.msra.mxu0 %v511
    %610 = vmatprep.subr.bf16.mxu0 %v516
    %611 = vmatpush1.bf16.msra.mxu0 %v515
    %612 = vmatprep.subr.bf16.mxu0 %v520
    %613 = vmatpush1.bf16.msra.mxu0 %v519
    %614 = vmatprep.subr.bf16.mxu0 %v524
    %615 = vmatpush1.bf16.msra.mxu0 %v523
    %616 = vmatprep.subr.bf16.mxu0 %v528
    %617 = vmatpush1.bf16.msra.mxu0 %v527
    %618 = vmatprep.subr.bf16.mxu0 0
    %619 = vmatpush1.bf16.msra.mxu0 0
    %620 = vmatprep.subr.bf16.mxu0 0
    %621 = vmatpush1.bf16.msra.mxu0 0
    %622 = vmatprep.subr.bf16.mxu0 0
    %623 = vmatpush1.bf16.msra.mxu0 0
    %624 = vmatprep.subr.bf16.mxu0 0
    %625 = vmatpush1.bf16.msra.mxu0 0
    %626 = vmatprep.subr.bf16.mxu0 0
    %627 = vmatpush1.bf16.msra.mxu0 0
    %628 = vmatprep.subr.bf16.mxu0 0
    %629 = vmatpush1.bf16.msra.mxu0 0
    %630 = vmatprep.subr.bf16.mxu0 0
    %631 = vmatpush1.bf16.msra.mxu0 0
    %632 = vmatprep.subr.bf16.mxu0 0
    %633 = vmatpush1.bf16.msra.mxu0 0
    %634 = vmatprep.mubr.bf16.mxu0 0
    %635 = vmatmul.mubr.bf16.gmra.mrb[0].mxu0 %v368
    %v636 = vpop.f32.mrb[0].mxu0
    %v637 = vadd.f32 0.0, %v636
    %v638 = vpop.f32.mrb[0].mxu0
    %v639 = vadd.f32 0.0, %v638
    %v640 = vpop.f32.mrb[0].mxu0
    %v641 = vpop.f32.mrb[0].mxu0
    %642 = vdwg.mxu0
    %v643 = vadd.f32 %v364, %v596
    %v644 = vadd.f32 %v365, %v598
    %v645 = vadd.f32 %v366, %v637
    %v646 = vadd.f32 %v367, %v639
    %v647 = vxor.u32 %v643, 2147483648
    %v648 = vmul.f32 %v647, 1.442695
    %v649 = vpow.pop %v648
    %v650 = vadd.f32 %v649, 1.0
    %v651 = vrcp.pop %v650
    %v652 = vmul.f32 1.0, %v651
    %v653 = vxor.u32 %v644, 2147483648
    %v654 = vmul.f32 %v653, 1.442695
    %v655 = vpow.pop %v654
    %v656 = vadd.f32 %v655, 1.0
    %v657 = vrcp.pop %v656
    %v658 = vmul.f32 1.0, %v657
    %v659 = vtanh.pop %v645
    %v660 = vxor.u32 %v646, 2147483648
    %v661 = vmul.f32 %v660, 1.442695
    %v662 = vpow.pop %v661
    %v663 = vadd.f32 %v662, 1.0
    %v664 = vrcp.pop %v663
    %v665 = vmul.f32 1.0, %v664
    %v666 = vmul.f32 %v658, %v360
    %v667 = vmul.f32 %v652, %v659
    %v668 = vadd.f32 %v666, %v667
    %v669 = vtanh.pop %v668
    %v670 = vmul.f32 %v665, %v669
    %s671 = scalar_lea.vmem [#allocation11], 8
    %672 = vst [vmem:[%s671] sm:$0xff] %v670
    %v673 = vld [vmem:[#allocation4 + $0x40] sm:$0xff]
    %v674 = vld [vmem:[#allocation4 + $0x48] sm:$0xff]
    %v675 = vld [vmem:[#allocation4 + $0x50] sm:$0xff]
    %v676 = vld [vmem:[#allocation4 + $0x58] sm:$0xff]
    %v677 = vpack.c.bf16 %v670, %v670
    %v678 = vld [vmem:[#allocation10] sm:$0xff]
    %v679 = vld [vmem:[#allocation10 + $0x8] sm:$0xff]
    %v680 = vld [vmem:[#allocation10 + $0x10] sm:$0xff]
    %v681 = vld [vmem:[#allocation10 + $0x18] sm:$0xff]
    %v682 = vld [vmem:[#allocation10 + $0x20] sm:$0xff]
    %v683 = vld [vmem:[#allocation10 + $0x28] sm:$0xff]
    %v684 = vld [vmem:[#allocation10 + $0x30] sm:$0xff]
    %v685 = vld [vmem:[#allocation10 + $0x38] sm:$0xff]
    %v686 = vld [vmem:[#allocation10 + $0x40] sm:$0xff]
    %v687 = vld [vmem:[#allocation10 + $0x48] sm:$0xff]
    %v688 = vld [vmem:[#allocation10 + $0x50] sm:$0xff]
    %v689 = vld [vmem:[#allocation10 + $0x58] sm:$0xff]
    %v690 = vld [vmem:[#allocation10 + $0x60] sm:$0xff]
    %v691 = vld [vmem:[#allocation10 + $0x68] sm:$0xff]
    %v692 = vld [vmem:[#allocation10 + $0x70] sm:$0xff]
    %v693 = vld [vmem:[#allocation10 + $0x78] sm:$0xff]
    %v694 = vld [vmem:[#allocation10 + $0x80] sm:$0xff]
    %v695 = vld [vmem:[#allocation10 + $0x88] sm:$0xff]
    %v696 = vld [vmem:[#allocation10 + $0x90] sm:$0xff]
    %v697 = vld [vmem:[#allocation10 + $0x98] sm:$0xff]
    %v698 = vld [vmem:[#allocation10 + $0xa0] sm:$0xff]
    %v699 = vld [vmem:[#allocation10 + $0xa8] sm:$0xff]
    %v700 = vld [vmem:[#allocation10 + $0xb0] sm:$0xff]
    %v701 = vld [vmem:[#allocation10 + $0xb8] sm:$0xff]
    %v702 = vld [vmem:[#allocation10 + $0xc0] sm:$0xff]
    %v703 = vld [vmem:[#allocation10 + $0xc8] sm:$0xff]
    %v704 = vld [vmem:[#allocation10 + $0xd0] sm:$0xff]
    %v705 = vld [vmem:[#allocation10 + $0xd8] sm:$0xff]
    %v706 = vld [vmem:[#allocation10 + $0xe0] sm:$0xff]
    %v707 = vld [vmem:[#allocation10 + $0xe8] sm:$0xff]
    %v708 = vld [vmem:[#allocation10 + $0xf0] sm:$0xff]
    %v709 = vld [vmem:[#allocation10 + $0xf8] sm:$0xff]
    %v742 = vunpack.c.l.b16 %v678
    %v743 = vunpack.c.h.b16 %v678
    %v744 = vunpack.c.l.b16 %v679
    %v745 = vunpack.c.h.b16 %v679
    %v746 = vunpack.c.l.b16 %v680
    %v747 = vunpack.c.h.b16 %v680
    %v748 = vunpack.c.l.b16 %v681
    %v749 = vunpack.c.h.b16 %v681
    %v750 = vunpack.c.l.b16 %v682
    %v751 = vunpack.c.h.b16 %v682
    %v752 = vunpack.c.l.b16 %v683
    %v753 = vunpack.c.h.b16 %v683
    %v754 = vunpack.c.l.b16 %v684
    %v755 = vunpack.c.h.b16 %v684
    %v756 = vunpack.c.l.b16 %v685
    %v757 = vunpack.c.h.b16 %v685
    %v758 = vunpack.c.l.b16 %v686
    %v759 = vunpack.c.h.b16 %v686
    %v760 = vunpack.c.l.b16 %v687
    %v761 = vunpack.c.h.b16 %v687
    %v762 = vunpack.c.l.b16 %v688
    %v763 = vunpack.c.h.b16 %v688
    %v764 = vunpack.c.l.b16 %v689
    %v765 = vunpack.c.h.b16 %v689
    %v766 = vunpack.c.l.b16 %v690
    %v767 = vunpack.c.h.b16 %v690
    %v768 = vunpack.c.l.b16 %v691
    %v769 = vunpack.c.h.b16 %v691
    %v770 = vunpack.c.l.b16 %v692
    %v771 = vunpack.c.h.b16 %v692
    %v772 = vunpack.c.l.b16 %v693
    %v773 = vunpack.c.h.b16 %v693
    %v774 = vunpack.c.l.b16 %v694
    %v775 = vunpack.c.h.b16 %v694
    %v776 = vunpack.c.l.b16 %v695
    %v777 = vunpack.c.h.b16 %v695
    %v778 = vunpack.c.l.b16 %v696
    %v779 = vunpack.c.h.b16 %v696
    %v780 = vunpack.c.l.b16 %v697
    %v781 = vunpack.c.h.b16 %v697
    %v782 = vunpack.c.l.b16 %v698
    %v783 = vunpack.c.h.b16 %v698
    %v784 = vunpack.c.l.b16 %v699
    %v785 = vunpack.c.h.b16 %v699
    %v786 = vunpack.c.l.b16 %v700
    %v787 = vunpack.c.h.b16 %v700
    %v788 = vunpack.c.l.b16 %v701
    %v789 = vunpack.c.h.b16 %v701
    %v790 = vunpack.c.l.b16 %v702
    %v791 = vunpack.c.h.b16 %v702
    %v792 = vunpack.c.l.b16 %v703
    %v793 = vunpack.c.h.b16 %v703
    %v794 = vunpack.c.l.b16 %v704
    %v795 = vunpack.c.h.b16 %v704
    %v796 = vunpack.c.l.b16 %v705
    %v797 = vunpack.c.h.b16 %v705
    %v798 = vunpack.c.l.b16 %v706
    %v799 = vunpack.c.h.b16 %v706
    %v800 = vunpack.c.l.b16 %v707
    %v801 = vunpack.c.h.b16 %v707
    %v802 = vunpack.c.l.b16 %v708
    %v803 = vunpack.c.h.b16 %v708
    %v804 = vunpack.c.l.b16 %v709
    %v805 = vunpack.c.h.b16 %v709
    %v806 = vpack.c.b16 %v746, %v742
    %v807 = vpack.c.b16 %v747, %v743
    %v808 = vpack.c.b16 %v748, %v744
    %v809 = vpack.c.b16 %v749, %v745
    %v810 = vpack.c.b16 %v754, %v750
    %v811 = vpack.c.b16 %v755, %v751
    %v812 = vpack.c.b16 %v756, %v752
    %v813 = vpack.c.b16 %v757, %v753
    %v814 = vpack.c.b16 %v762, %v758
    %v815 = vpack.c.b16 %v763, %v759
    %v816 = vpack.c.b16 %v764, %v760
    %v817 = vpack.c.b16 %v765, %v761
    %v818 = vpack.c.b16 %v770, %v766
    %v819 = vpack.c.b16 %v771, %v767
    %v820 = vpack.c.b16 %v772, %v768
    %v821 = vpack.c.b16 %v773, %v769
    %v822 = vpack.c.b16 %v778, %v774
    %v823 = vpack.c.b16 %v779, %v775
    %v824 = vpack.c.b16 %v780, %v776
    %v825 = vpack.c.b16 %v781, %v777
    %v826 = vpack.c.b16 %v786, %v782
    %v827 = vpack.c.b16 %v787, %v783
    %v828 = vpack.c.b16 %v788, %v784
    %v829 = vpack.c.b16 %v789, %v785
    %v830 = vpack.c.b16 %v794, %v790
    %v831 = vpack.c.b16 %v795, %v791
    %v832 = vpack.c.b16 %v796, %v792
    %v833 = vpack.c.b16 %v797, %v793
    %v834 = vpack.c.b16 %v802, %v798
    %v835 = vpack.c.b16 %v803, %v799
    %v836 = vpack.c.b16 %v804, %v800
    %v837 = vpack.c.b16 %v805, %v801
    %870 = vmatprep.subr.bf16.mxu0 %v807
    %871 = vmatpush1.bf16.msra.mxu0 %v806
    %872 = vmatprep.subr.bf16.mxu0 %v811
    %873 = vmatpush1.bf16.msra.mxu0 %v810
    %874 = vmatprep.subr.bf16.mxu0 %v815
    %875 = vmatpush1.bf16.msra.mxu0 %v814
    %876 = vmatprep.subr.bf16.mxu0 %v819
    %877 = vmatpush1.bf16.msra.mxu0 %v818
    %878 = vmatprep.subr.bf16.mxu0 %v823
    %879 = vmatpush1.bf16.msra.mxu0 %v822
    %880 = vmatprep.subr.bf16.mxu0 %v827
    %881 = vmatpush1.bf16.msra.mxu0 %v826
    %882 = vmatprep.subr.bf16.mxu0 %v831
    %883 = vmatpush1.bf16.msra.mxu0 %v830
    %884 = vmatprep.subr.bf16.mxu0 %v835
    %885 = vmatpush1.bf16.msra.mxu0 %v834
    %886 = vmatprep.subr.bf16.mxu0 0
    %887 = vmatpush1.bf16.msra.mxu0 0
    %888 = vmatprep.subr.bf16.mxu0 0
    %889 = vmatpush1.bf16.msra.mxu0 0
    %890 = vmatprep.subr.bf16.mxu0 0
    %891 = vmatpush1.bf16.msra.mxu0 0
    %892 = vmatprep.subr.bf16.mxu0 0
    %893 = vmatpush1.bf16.msra.mxu0 0
    %894 = vmatprep.subr.bf16.mxu0 0
    %895 = vmatpush1.bf16.msra.mxu0 0
    %896 = vmatprep.subr.bf16.mxu0 0
    %897 = vmatpush1.bf16.msra.mxu0 0
    %898 = vmatprep.subr.bf16.mxu0 0
    %899 = vmatpush1.bf16.msra.mxu0 0
    %900 = vmatprep.subr.bf16.mxu0 0
    %901 = vmatpush1.bf16.msra.mxu0 0
    %902 = vmatprep.mubr.bf16.mxu0 0
    %903 = vmatmul.mubr.bf16.gmra.mrb[0].mxu0 %v677
    %v904 = vpop.f32.mrb[0].mxu0
    %v905 = vadd.f32 0.0, %v904
    %v906 = vpop.f32.mrb[0].mxu0
    %v907 = vadd.f32 0.0, %v906
    %v908 = vpop.f32.mrb[0].mxu0
    %v909 = vpop.f32.mrb[0].mxu0
    %910 = vdwg.mxu0
    %911 = vmatprep.subr.bf16.mxu0 %v809
    %912 = vmatpush1.bf16.msra.mxu0 %v808
    %913 = vmatprep.subr.bf16.mxu0 %v813
    %914 = vmatpush1.bf16.msra.mxu0 %v812
    %915 = vmatprep.subr.bf16.mxu0 %v817
    %916 = vmatpush1.bf16.msra.mxu0 %v816
    %917 = vmatprep.subr.bf16.mxu0 %v821
    %918 = vmatpush1.bf16.msra.mxu0 %v820
    %919 = vmatprep.subr.bf16.mxu0 %v825
    %920 = vmatpush1.bf16.msra.mxu0 %v824
    %921 = vmatprep.subr.bf16.mxu0 %v829
    %922 = vmatpush1.bf16.msra.mxu0 %v828
    %923 = vmatprep.subr.bf16.mxu0 %v833
    %924 = vmatpush1.bf16.msra.mxu0 %v832
    %925 = vmatprep.subr.bf16.mxu0 %v837
    %926 = vmatpush1.bf16.msra.mxu0 %v836
    %927 = vmatprep.subr.bf16.mxu0 0
    %928 = vmatpush1.bf16.msra.mxu0 0
    %929 = vmatprep.subr.bf16.mxu0 0
    %930 = vmatpush1.bf16.msra.mxu0 0
    %931 = vmatprep.subr.bf16.mxu0 0
    %932 = vmatpush1.bf16.msra.mxu0 0
    %933 = vmatprep.subr.bf16.mxu0 0
    %934 = vmatpush1.bf16.msra.mxu0 0
    %935 = vmatprep.subr.bf16.mxu0 0
    %936 = vmatpush1.bf16.msra.mxu0 0
    %937 = vmatprep.subr.bf16.mxu0 0
    %938 = vmatpush1.bf16.msra.mxu0 0
    %939 = vmatprep.subr.bf16.mxu0 0
    %940 = vmatpush1.bf16.msra.mxu0 0
    %941 = vmatprep.subr.bf16.mxu0 0
    %942 = vmatpush1.bf16.msra.mxu0 0
    %943 = vmatprep.mubr.bf16.mxu0 0
    %944 = vmatmul.mubr.bf16.gmra.mrb[0].mxu0 %v677
    %v945 = vpop.f32.mrb[0].mxu0
    %v946 = vadd.f32 0.0, %v945
    %v947 = vpop.f32.mrb[0].mxu0
    %v948 = vadd.f32 0.0, %v947
    %v949 = vpop.f32.mrb[0].mxu0
    %v950 = vpop.f32.mrb[0].mxu0
    %951 = vdwg.mxu0
    %v952 = vadd.f32 %v673, %v905
    %v953 = vadd.f32 %v674, %v907
    %v954 = vadd.f32 %v675, %v946
    %v955 = vadd.f32 %v676, %v948
    %v956 = vxor.u32 %v952, 2147483648
    %v957 = vmul.f32 %v956, 1.442695
    %v958 = vpow.pop %v957
    %v959 = vadd.f32 %v958, 1.0
    %v960 = vrcp.pop %v959
    %v961 = vmul.f32 1.0, %v960
    %v962 = vxor.u32 %v953, 2147483648
    %v963 = vmul.f32 %v962, 1.442695
    %v964 = vpow.pop %v963
    %v965 = vadd.f32 %v964, 1.0
    %v966 = vrcp.pop %v965
    %v967 = vmul.f32 1.0, %v966
    %v968 = vtanh.pop %v954
    %v969 = vxor.u32 %v955, 2147483648
    %v970 = vmul.f32 %v969, 1.442695
    %v971 = vpow.pop %v970
    %v972 = vadd.f32 %v971, 1.0
    %v973 = vrcp.pop %v972
    %v974 = vmul.f32 1.0, %v973
    %v975 = vmul.f32 %v967, %v668
    %v976 = vmul.f32 %v961, %v968
    %v977 = vadd.f32 %v975, %v976
    %v978 = vtanh.pop %v977
    %v979 = vmul.f32 %v974, %v978
    %s980 = scalar_lea.vmem [#allocation11], 16
    %981 = vst [vmem:[%s980] sm:$0xff] %v979
    %v982 = vld [vmem:[#allocation4 + $0x60] sm:$0xff]
    %v983 = vld [vmem:[#allocation4 + $0x68] sm:$0xff]
    %v984 = vld [vmem:[#allocation4 + $0x70] sm:$0xff]
    %v985 = vld [vmem:[#allocation4 + $0x78] sm:$0xff]
    %v986 = vpack.c.bf16 %v979, %v979
    %v987 = vld [vmem:[#allocation10] sm:$0xff]
    %v988 = vld [vmem:[#allocation10 + $0x8] sm:$0xff]
    %v989 = vld [vmem:[#allocation10 + $0x10] sm:$0xff]
    %v990 = vld [vmem:[#allocation10 + $0x18] sm:$0xff]
    %v991 = vld [vmem:[#allocation10 + $0x20] sm:$0xff]
    %v992 = vld [vmem:[#allocation10 + $0x28] sm:$0xff]
    %v993 = vld [vmem:[#allocation10 + $0x30] sm:$0xff]
    %v994 = vld [vmem:[#allocation10 + $0x38] sm:$0xff]
    %v995 = vld [vmem:[#allocation10 + $0x40] sm:$0xff]
    %v996 = vld [vmem:[#allocation10 + $0x48] sm:$0xff]
    %v997 = vld [vmem:[#allocation10 + $0x50] sm:$0xff]
    %v998 = vld [vmem:[#allocation10 + $0x58] sm:$0xff]
    %v999 = vld [vmem:[#allocation10 + $0x60] sm:$0xff]
    %v1000 = vld [vmem:[#allocation10 + $0x68] sm:$0xff]
    %v1001 = vld [vmem:[#allocation10 + $0x70] sm:$0xff]
    %v1002 = vld [vmem:[#allocation10 + $0x78] sm:$0xff]
    %v1003 = vld [vmem:[#allocation10 + $0x80] sm:$0xff]
    %v1004 = vld [vmem:[#allocation10 + $0x88] sm:$0xff]
    %v1005 = vld [vmem:[#allocation10 + $0x90] sm:$0xff]
    %v1006 = vld [vmem:[#allocation10 + $0x98] sm:$0xff]
    %v1007 = vld [vmem:[#allocation10 + $0xa0] sm:$0xff]
    %v1008 = vld [vmem:[#allocation10 + $0xa8] sm:$0xff]
    %v1009 = vld [vmem:[#allocation10 + $0xb0] sm:$0xff]
    %v1010 = vld [vmem:[#allocation10 + $0xb8] sm:$0xff]
    %v1011 = vld [vmem:[#allocation10 + $0xc0] sm:$0xff]
    %v1012 = vld [vmem:[#allocation10 + $0xc8] sm:$0xff]
    %v1013 = vld [vmem:[#allocation10 + $0xd0] sm:$0xff]
    %v1014 = vld [vmem:[#allocation10 + $0xd8] sm:$0xff]
    %v1015 = vld [vmem:[#allocation10 + $0xe0] sm:$0xff]
    %v1016 = vld [vmem:[#allocation10 + $0xe8] sm:$0xff]
    %v1017 = vld [vmem:[#allocation10 + $0xf0] sm:$0xff]
    %v1018 = vld [vmem:[#allocation10 + $0xf8] sm:$0xff]
    %v1051 = vunpack.c.l.b16 %v987
    %v1052 = vunpack.c.h.b16 %v987
    %v1053 = vunpack.c.l.b16 %v988
    %v1054 = vunpack.c.h.b16 %v988
    %v1055 = vunpack.c.l.b16 %v989
    %v1056 = vunpack.c.h.b16 %v989
    %v1057 = vunpack.c.l.b16 %v990
    %v1058 = vunpack.c.h.b16 %v990
    %v1059 = vunpack.c.l.b16 %v991
    %v1060 = vunpack.c.h.b16 %v991
    %v1061 = vunpack.c.l.b16 %v992
    %v1062 = vunpack.c.h.b16 %v992
    %v1063 = vunpack.c.l.b16 %v993
    %v1064 = vunpack.c.h.b16 %v993
    %v1065 = vunpack.c.l.b16 %v994
    %v1066 = vunpack.c.h.b16 %v994
    %v1067 = vunpack.c.l.b16 %v995
    %v1068 = vunpack.c.h.b16 %v995
    %v1069 = vunpack.c.l.b16 %v996
    %v1070 = vunpack.c.h.b16 %v996
    %v1071 = vunpack.c.l.b16 %v997
    %v1072 = vunpack.c.h.b16 %v997
    %v1073 = vunpack.c.l.b16 %v998
    %v1074 = vunpack.c.h.b16 %v998
    %v1075 = vunpack.c.l.b16 %v999
    %v1076 = vunpack.c.h.b16 %v999
    %v1077 = vunpack.c.l.b16 %v1000
    %v1078 = vunpack.c.h.b16 %v1000
    %v1079 = vunpack.c.l.b16 %v1001
    %v1080 = vunpack.c.h.b16 %v1001
    %v1081 = vunpack.c.l.b16 %v1002
    %v1082 = vunpack.c.h.b16 %v1002
    %v1083 = vunpack.c.l.b16 %v1003
    %v1084 = vunpack.c.h.b16 %v1003
    %v1085 = vunpack.c.l.b16 %v1004
    %v1086 = vunpack.c.h.b16 %v1004
    %v1087 = vunpack.c.l.b16 %v1005
    %v1088 = vunpack.c.h.b16 %v1005
    %v1089 = vunpack.c.l.b16 %v1006
    %v1090 = vunpack.c.h.b16 %v1006
    %v1091 = vunpack.c.l.b16 %v1007
    %v1092 = vunpack.c.h.b16 %v1007
    %v1093 = vunpack.c.l.b16 %v1008
    %v1094 = vunpack.c.h.b16 %v1008
    %v1095 = vunpack.c.l.b16 %v1009
    %v1096 = vunpack.c.h.b16 %v1009
    %v1097 = vunpack.c.l.b16 %v1010
    %v1098 = vunpack.c.h.b16 %v1010
    %v1099 = vunpack.c.l.b16 %v1011
    %v1100 = vunpack.c.h.b16 %v1011
    %v1101 = vunpack.c.l.b16 %v1012
    %v1102 = vunpack.c.h.b16 %v1012
    %v1103 = vunpack.c.l.b16 %v1013
    %v1104 = vunpack.c.h.b16 %v1013
    %v1105 = vunpack.c.l.b16 %v1014
    %v1106 = vunpack.c.h.b16 %v1014
    %v1107 = vunpack.c.l.b16 %v1015
    %v1108 = vunpack.c.h.b16 %v1015
    %v1109 = vunpack.c.l.b16 %v1016
    %v1110 = vunpack.c.h.b16 %v1016
    %v1111 = vunpack.c.l.b16 %v1017
    %v1112 = vunpack.c.h.b16 %v1017
    %v1113 = vunpack.c.l.b16 %v1018
    %v1114 = vunpack.c.h.b16 %v1018
    %v1115 = vpack.c.b16 %v1055, %v1051
    %v1116 = vpack.c.b16 %v1056, %v1052
    %v1117 = vpack.c.b16 %v1057, %v1053
    %v1118 = vpack.c.b16 %v1058, %v1054
    %v1119 = vpack.c.b16 %v1063, %v1059
    %v1120 = vpack.c.b16 %v1064, %v1060
    %v1121 = vpack.c.b16 %v1065, %v1061
    %v1122 = vpack.c.b16 %v1066, %v1062
    %v1123 = vpack.c.b16 %v1071, %v1067
    %v1124 = vpack.c.b16 %v1072, %v1068
    %v1125 = vpack.c.b16 %v1073, %v1069
    %v1126 = vpack.c.b16 %v1074, %v1070
    %v1127 = vpack.c.b16 %v1079, %v1075
    %v1128 = vpack.c.b16 %v1080, %v1076
    %v1129 = vpack.c.b16 %v1081, %v1077
    %v1130 = vpack.c.b16 %v1082, %v1078
    %v1131 = vpack.c.b16 %v1087, %v1083
    %v1132 = vpack.c.b16 %v1088, %v1084
    %v1133 = vpack.c.b16 %v1089, %v1085
    %v1134 = vpack.c.b16 %v1090, %v1086
    %v1135 = vpack.c.b16 %v1095, %v1091
    %v1136 = vpack.c.b16 %v1096, %v1092
    %v1137 = vpack.c.b16 %v1097, %v1093
    %v1138 = vpack.c.b16 %v1098, %v1094
    %v1139 = vpack.c.b16 %v1103, %v1099
    %v1140 = vpack.c.b16 %v1104, %v1100
    %v1141 = vpack.c.b16 %v1105, %v1101
    %v1142 = vpack.c.b16 %v1106, %v1102
    %v1143 = vpack.c.b16 %v1111, %v1107
    %v1144 = vpack.c.b16 %v1112, %v1108
    %v1145 = vpack.c.b16 %v1113, %v1109
    %v1146 = vpack.c.b16 %v1114, %v1110
    %1179 = vmatprep.subr.bf16.mxu0 %v1116
    %1180 = vmatpush1.bf16.msra.mxu0 %v1115
    %1181 = vmatprep.subr.bf16.mxu0 %v1120
    %1182 = vmatpush1.bf16.msra.mxu0 %v1119
    %1183 = vmatprep.subr.bf16.mxu0 %v1124
    %1184 = vmatpush1.bf16.msra.mxu0 %v1123
    %1185 = vmatprep.subr.bf16.mxu0 %v1128
    %1186 = vmatpush1.bf16.msra.mxu0 %v1127
    %1187 = vmatprep.subr.bf16.mxu0 %v1132
    %1188 = vmatpush1.bf16.msra.mxu0 %v1131
    %1189 = vmatprep.subr.bf16.mxu0 %v1136
    %1190 = vmatpush1.bf16.msra.mxu0 %v1135
    %1191 = vmatprep.subr.bf16.mxu0 %v1140
    %1192 = vmatpush1.bf16.msra.mxu0 %v1139
    %1193 = vmatprep.subr.bf16.mxu0 %v1144
    %1194 = vmatpush1.bf16.msra.mxu0 %v1143
    %1195 = vmatprep.subr.bf16.mxu0 0
    %1196 = vmatpush1.bf16.msra.mxu0 0
    %1197 = vmatprep.subr.bf16.mxu0 0
    %1198 = vmatpush1.bf16.msra.mxu0 0
    %1199 = vmatprep.subr.bf16.mxu0 0
    %1200 = vmatpush1.bf16.msra.mxu0 0
    %1201 = vmatprep.subr.bf16.mxu0 0
    %1202 = vmatpush1.bf16.msra.mxu0 0
    %1203 = vmatprep.subr.bf16.mxu0 0
    %1204 = vmatpush1.bf16.msra.mxu0 0
    %1205 = vmatprep.subr.bf16.mxu0 0
    %1206 = vmatpush1.bf16.msra.mxu0 0
    %1207 = vmatprep.subr.bf16.mxu0 0
    %1208 = vmatpush1.bf16.msra.mxu0 0
    %1209 = vmatprep.subr.bf16.mxu0 0
    %1210 = vmatpush1.bf16.msra.mxu0 0
    %1211 = vmatprep.mubr.bf16.mxu0 0
    %1212 = vmatmul.mubr.bf16.gmra.mrb[0].mxu0 %v986
    %v1213 = vpop.f32.mrb[0].mxu0
    %v1214 = vadd.f32 0.0, %v1213
    %v1215 = vpop.f32.mrb[0].mxu0
    %v1216 = vadd.f32 0.0, %v1215
    %v1217 = vpop.f32.mrb[0].mxu0
    %v1218 = vpop.f32.mrb[0].mxu0
    %1219 = vdwg.mxu0
    %1220 = vmatprep.subr.bf16.mxu0 %v1118
    %1221 = vmatpush1.bf16.msra.mxu0 %v1117
    %1222 = vmatprep.subr.bf16.mxu0 %v1122
    %1223 = vmatpush1.bf16.msra.mxu0 %v1121
    %1224 = vmatprep.subr.bf16.mxu0 %v1126
    %1225 = vmatpush1.bf16.msra.mxu0 %v1125
    %1226 = vmatprep.subr.bf16.mxu0 %v1130
    %1227 = vmatpush1.bf16.msra.mxu0 %v1129
    %1228 = vmatprep.subr.bf16.mxu0 %v1134
    %1229 = vmatpush1.bf16.msra.mxu0 %v1133
    %1230 = vmatprep.subr.bf16.mxu0 %v1138
    %1231 = vmatpush1.bf16.msra.mxu0 %v1137
    %1232 = vmatprep.subr.bf16.mxu0 %v1142
    %1233 = vmatpush1.bf16.msra.mxu0 %v1141
    %1234 = vmatprep.subr.bf16.mxu0 %v1146
    %1235 = vmatpush1.bf16.msra.mxu0 %v1145
    %1236 = vmatprep.subr.bf16.mxu0 0
    %1237 = vmatpush1.bf16.msra.mxu0 0
    %1238 = vmatprep.subr.bf16.mxu0 0
    %1239 = vmatpush1.bf16.msra.mxu0 0
    %1240 = vmatprep.subr.bf16.mxu0 0
    %1241 = vmatpush1.bf16.msra.mxu0 0
    %1242 = vmatprep.subr.bf16.mxu0 0
    %1243 = vmatpush1.bf16.msra.mxu0 0
    %1244 = vmatprep.subr.bf16.mxu0 0
    %1245 = vmatpush1.bf16.msra.mxu0 0
    %1246 = vmatprep.subr.bf16.mxu0 0
    %1247 = vmatpush1.bf16.msra.mxu0 0
    %1248 = vmatprep.subr.bf16.mxu0 0
    %1249 = vmatpush1.bf16.msra.mxu0 0
    %1250 = vmatprep.subr.bf16.mxu0 0
    %1251 = vmatpush1.bf16.msra.mxu0 0
    %1252 = vmatprep.mubr.bf16.mxu0 0
    %1253 = vmatmul.mubr.bf16.gmra.mrb[0].mxu0 %v986
    %v1254 = vpop.f32.mrb[0].mxu0
    %v1255 = vadd.f32 0.0, %v1254
    %v1256 = vpop.f32.mrb[0].mxu0
    %v1257 = vadd.f32 0.0, %v1256
    %v1258 = vpop.f32.mrb[0].mxu0
    %v1259 = vpop.f32.mrb[0].mxu0
    %1260 = vdwg.mxu0
    %v1261 = vadd.f32 %v982, %v1214
    %v1262 = vadd.f32 %v983, %v1216
    %v1263 = vadd.f32 %v984, %v1255
    %v1264 = vadd.f32 %v985, %v1257
    %v1265 = vxor.u32 %v1261, 2147483648
    %v1266 = vmul.f32 %v1265, 1.442695
    %v1267 = vpow.pop %v1266
    %v1268 = vadd.f32 %v1267, 1.0
    %v1269 = vrcp.pop %v1268
    %v1270 = vmul.f32 1.0, %v1269
    %v1271 = vxor.u32 %v1262, 2147483648
    %v1272 = vmul.f32 %v1271, 1.442695
    %v1273 = vpow.pop %v1272
    %v1274 = vadd.f32 %v1273, 1.0
    %v1275 = vrcp.pop %v1274
    %v1276 = vmul.f32 1.0, %v1275
    %v1277 = vtanh.pop %v1263
    %v1278 = vxor.u32 %v1264, 2147483648
    %v1279 = vmul.f32 %v1278, 1.442695
    %v1280 = vpow.pop %v1279
    %v1281 = vadd.f32 %v1280, 1.0
    %v1282 = vrcp.pop %v1281
    %v1283 = vmul.f32 1.0, %v1282
    %v1284 = vmul.f32 %v1276, %v977
    %v1285 = vmul.f32 %v1270, %v1277
    %v1286 = vadd.f32 %v1284, %v1285
    %v1287 = vtanh.pop %v1286
    %v1288 = vmul.f32 %v1283, %v1287
    %s1289 = scalar_lea.vmem [#allocation11], 24
    %1290 = vst [vmem:[%s1289] sm:$0xff] %v1288
    %v1291 = vld [vmem:[#allocation4 + $0x80] sm:$0xff]
    %v1292 = vld [vmem:[#allocation4 + $0x88] sm:$0xff]
    %v1293 = vld [vmem:[#allocation4 + $0x90] sm:$0xff]
    %v1294 = vld [vmem:[#allocation4 + $0x98] sm:$0xff]
    %v1295 = vpack.c.bf16 %v1288, %v1288
    %v1296 = vld [vmem:[#allocation10] sm:$0xff]
    %v1297 = vld [vmem:[#allocation10 + $0x8] sm:$0xff]
    %v1298 = vld [vmem:[#allocation10 + $0x10] sm:$0xff]
    %v1299 = vld [vmem:[#allocation10 + $0x18] sm:$0xff]
    %v1300 = vld [vmem:[#allocation10 + $0x20] sm:$0xff]
    %v1301 = vld [vmem:[#allocation10 + $0x28] sm:$0xff]
    %v1302 = vld [vmem:[#allocation10 + $0x30] sm:$0xff]
    %v1303 = vld [vmem:[#allocation10 + $0x38] sm:$0xff]
    %v1304 = vld [vmem:[#allocation10 + $0x40] sm:$0xff]
    %v1305 = vld [vmem:[#allocation10 + $0x48] sm:$0xff]
    %v1306 = vld [vmem:[#allocation10 + $0x50] sm:$0xff]
    %v1307 = vld [vmem:[#allocation10 + $0x58] sm:$0xff]
    %v1308 = vld [vmem:[#allocation10 + $0x60] sm:$0xff]
    %v1309 = vld [vmem:[#allocation10 + $0x68] sm:$0xff]
    %v1310 = vld [vmem:[#allocation10 + $0x70] sm:$0xff]
    %v1311 = vld [vmem:[#allocation10 + $0x78] sm:$0xff]
    %v1312 = vld [vmem:[#allocation10 + $0x80] sm:$0xff]
    %v1313 = vld [vmem:[#allocation10 + $0x88] sm:$0xff]
    %v1314 = vld [vmem:[#allocation10 + $0x90] sm:$0xff]
    %v1315 = vld [vmem:[#allocation10 + $0x98] sm:$0xff]
    %v1316 = vld [vmem:[#allocation10 + $0xa0] sm:$0xff]
    %v1317 = vld [vmem:[#allocation10 + $0xa8] sm:$0xff]
    %v1318 = vld [vmem:[#allocation10 + $0xb0] sm:$0xff]
    %v1319 = vld [vmem:[#allocation10 + $0xb8] sm:$0xff]
    %v1320 = vld [vmem:[#allocation10 + $0xc0] sm:$0xff]
    %v1321 = vld [vmem:[#allocation10 + $0xc8] sm:$0xff]
    %v1322 = vld [vmem:[#allocation10 + $0xd0] sm:$0xff]
    %v1323 = vld [vmem:[#allocation10 + $0xd8] sm:$0xff]
    %v1324 = vld [vmem:[#allocation10 + $0xe0] sm:$0xff]
    %v1325 = vld [vmem:[#allocation10 + $0xe8] sm:$0xff]
    %v1326 = vld [vmem:[#allocation10 + $0xf0] sm:$0xff]
    %v1327 = vld [vmem:[#allocation10 + $0xf8] sm:$0xff]
    %v1360 = vunpack.c.l.b16 %v1296
    %v1361 = vunpack.c.h.b16 %v1296
    %v1362 = vunpack.c.l.b16 %v1297
    %v1363 = vunpack.c.h.b16 %v1297
    %v1364 = vunpack.c.l.b16 %v1298
    %v1365 = vunpack.c.h.b16 %v1298
    %v1366 = vunpack.c.l.b16 %v1299
    %v1367 = vunpack.c.h.b16 %v1299
    %v1368 = vunpack.c.l.b16 %v1300
    %v1369 = vunpack.c.h.b16 %v1300
    %v1370 = vunpack.c.l.b16 %v1301
    %v1371 = vunpack.c.h.b16 %v1301
    %v1372 = vunpack.c.l.b16 %v1302
    %v1373 = vunpack.c.h.b16 %v1302
    %v1374 = vunpack.c.l.b16 %v1303
    %v1375 = vunpack.c.h.b16 %v1303
    %v1376 = vunpack.c.l.b16 %v1304
    %v1377 = vunpack.c.h.b16 %v1304
    %v1378 = vunpack.c.l.b16 %v1305
    %v1379 = vunpack.c.h.b16 %v1305
    %v1380 = vunpack.c.l.b16 %v1306
    %v1381 = vunpack.c.h.b16 %v1306
    %v1382 = vunpack.c.l.b16 %v1307
    %v1383 = vunpack.c.h.b16 %v1307
    %v1384 = vunpack.c.l.b16 %v1308
    %v1385 = vunpack.c.h.b16 %v1308
    %v1386 = vunpack.c.l.b16 %v1309
    %v1387 = vunpack.c.h.b16 %v1309
    %v1388 = vunpack.c.l.b16 %v1310
    %v1389 = vunpack.c.h.b16 %v1310
    %v1390 = vunpack.c.l.b16 %v1311
    %v1391 = vunpack.c.h.b16 %v1311
    %v1392 = vunpack.c.l.b16 %v1312
    %v1393 = vunpack.c.h.b16 %v1312
    %v1394 = vunpack.c.l.b16 %v1313
    %v1395 = vunpack.c.h.b16 %v1313
    %v1396 = vunpack.c.l.b16 %v1314
    %v1397 = vunpack.c.h.b16 %v1314
    %v1398 = vunpack.c.l.b16 %v1315
    %v1399 = vunpack.c.h.b16 %v1315
    %v1400 = vunpack.c.l.b16 %v1316
    %v1401 = vunpack.c.h.b16 %v1316
    %v1402 = vunpack.c.l.b16 %v1317
    %v1403 = vunpack.c.h.b16 %v1317
    %v1404 = vunpack.c.l.b16 %v1318
    %v1405 = vunpack.c.h.b16 %v1318
    %v1406 = vunpack.c.l.b16 %v1319
    %v1407 = vunpack.c.h.b16 %v1319
    %v1408 = vunpack.c.l.b16 %v1320
    %v1409 = vunpack.c.h.b16 %v1320
    %v1410 = vunpack.c.l.b16 %v1321
    %v1411 = vunpack.c.h.b16 %v1321
    %v1412 = vunpack.c.l.b16 %v1322
    %v1413 = vunpack.c.h.b16 %v1322
    %v1414 = vunpack.c.l.b16 %v1323
    %v1415 = vunpack.c.h.b16 %v1323
    %v1416 = vunpack.c.l.b16 %v1324
    %v1417 = vunpack.c.h.b16 %v1324
    %v1418 = vunpack.c.l.b16 %v1325
    %v1419 = vunpack.c.h.b16 %v1325
    %v1420 = vunpack.c.l.b16 %v1326
    %v1421 = vunpack.c.h.b16 %v1326
    %v1422 = vunpack.c.l.b16 %v1327
    %v1423 = vunpack.c.h.b16 %v1327
    %v1424 = vpack.c.b16 %v1364, %v1360
    %v1425 = vpack.c.b16 %v1365, %v1361
    %v1426 = vpack.c.b16 %v1366, %v1362
    %v1427 = vpack.c.b16 %v1367, %v1363
    %v1428 = vpack.c.b16 %v1372, %v1368
    %v1429 = vpack.c.b16 %v1373, %v1369
    %v1430 = vpack.c.b16 %v1374, %v1370
    %v1431 = vpack.c.b16 %v1375, %v1371
    %v1432 = vpack.c.b16 %v1380, %v1376
    %v1433 = vpack.c.b16 %v1381, %v1377
    %v1434 = vpack.c.b16 %v1382, %v1378
    %v1435 = vpack.c.b16 %v1383, %v1379
    %v1436 = vpack.c.b16 %v1388, %v1384
    %v1437 = vpack.c.b16 %v1389, %v1385
    %v1438 = vpack.c.b16 %v1390, %v1386
    %v1439 = vpack.c.b16 %v1391, %v1387
    %v1440 = vpack.c.b16 %v1396, %v1392
    %v1441 = vpack.c.b16 %v1397, %v1393
    %v1442 = vpack.c.b16 %v1398, %v1394
    %v1443 = vpack.c.b16 %v1399, %v1395
    %v1444 = vpack.c.b16 %v1404, %v1400
    %v1445 = vpack.c.b16 %v1405, %v1401
    %v1446 = vpack.c.b16 %v1406, %v1402
    %v1447 = vpack.c.b16 %v1407, %v1403
    %v1448 = vpack.c.b16 %v1412, %v1408
    %v1449 = vpack.c.b16 %v1413, %v1409
    %v1450 = vpack.c.b16 %v1414, %v1410
    %v1451 = vpack.c.b16 %v1415, %v1411
    %v1452 = vpack.c.b16 %v1420, %v1416
    %v1453 = vpack.c.b16 %v1421, %v1417
    %v1454 = vpack.c.b16 %v1422, %v1418
    %v1455 = vpack.c.b16 %v1423, %v1419
    %1488 = vmatprep.subr.bf16.mxu0 %v1425
    %1489 = vmatpush1.bf16.msra.mxu0 %v1424
    %1490 = vmatprep.subr.bf16.mxu0 %v1429
    %1491 = vmatpush1.bf16.msra.mxu0 %v1428
    %1492 = vmatprep.subr.bf16.mxu0 %v1433
    %1493 = vmatpush1.bf16.msra.mxu0 %v1432
    %1494 = vmatprep.subr.bf16.mxu0 %v1437
    %1495 = vmatpush1.bf16.msra.mxu0 %v1436
    %1496 = vmatprep.subr.bf16.mxu0 %v1441
    %1497 = vmatpush1.bf16.msra.mxu0 %v1440
    %1498 = vmatprep.subr.bf16.mxu0 %v1445
    %1499 = vmatpush1.bf16.msra.mxu0 %v1444
    %1500 = vmatprep.subr.bf16.mxu0 %v1449
    %1501 = vmatpush1.bf16.msra.mxu0 %v1448
    %1502 = vmatprep.subr.bf16.mxu0 %v1453
    %1503 = vmatpush1.bf16.msra.mxu0 %v1452
    %1504 = vmatprep.subr.bf16.mxu0 0
    %1505 = vmatpush1.bf16.msra.mxu0 0
    %1506 = vmatprep.subr.bf16.mxu0 0
    %1507 = vmatpush1.bf16.msra.mxu0 0
    %1508 = vmatprep.subr.bf16.mxu0 0
    %1509 = vmatpush1.bf16.msra.mxu0 0
    %1510 = vmatprep.subr.bf16.mxu0 0
    %1511 = vmatpush1.bf16.msra.mxu0 0
    %1512 = vmatprep.subr.bf16.mxu0 0
    %1513 = vmatpush1.bf16.msra.mxu0 0
    %1514 = vmatprep.subr.bf16.mxu0 0
    %1515 = vmatpush1.bf16.msra.mxu0 0
    %1516 = vmatprep.subr.bf16.mxu0 0
    %1517 = vmatpush1.bf16.msra.mxu0 0
    %1518 = vmatprep.subr.bf16.mxu0 0
    %1519 = vmatpush1.bf16.msra.mxu0 0
    %1520 = vmatprep.mubr.bf16.mxu0 0
    %1521 = vmatmul.mubr.bf16.gmra.mrb[0].mxu0 %v1295
    %v1522 = vpop.f32.mrb[0].mxu0
    %v1523 = vadd.f32 0.0, %v1522
    %v1524 = vpop.f32.mrb[0].mxu0
    %v1525 = vadd.f32 0.0, %v1524
    %v1526 = vpop.f32.mrb[0].mxu0
    %v1527 = vpop.f32.mrb[0].mxu0
    %1528 = vdwg.mxu0
    %1529 = vmatprep.subr.bf16.mxu0 %v1427
    %1530 = vmatpush1.bf16.msra.mxu0 %v1426
    %1531 = vmatprep.subr.bf16.mxu0 %v1431
    %1532 = vmatpush1.bf16.msra.mxu0 %v1430
    %1533 = vmatprep.subr.bf16.mxu0 %v1435
    %1534 = vmatpush1.bf16.msra.mxu0 %v1434
    %1535 = vmatprep.subr.bf16.mxu0 %v1439
    %1536 = vmatpush1.bf16.msra.mxu0 %v1438
    %1537 = vmatprep.subr.bf16.mxu0 %v1443
    %1538 = vmatpush1.bf16.msra.mxu0 %v1442
    %1539 = vmatprep.subr.bf16.mxu0 %v1447
    %1540 = vmatpush1.bf16.msra.mxu0 %v1446
    %1541 = vmatprep.subr.bf16.mxu0 %v1451
    %1542 = vmatpush1.bf16.msra.mxu0 %v1450
    %1543 = vmatprep.subr.bf16.mxu0 %v1455
    %1544 = vmatpush1.bf16.msra.mxu0 %v1454
    %1545 = vmatprep.subr.bf16.mxu0 0
    %1546 = vmatpush1.bf16.msra.mxu0 0
    %1547 = vmatprep.subr.bf16.mxu0 0
    %1548 = vmatpush1.bf16.msra.mxu0 0
    %1549 = vmatprep.subr.bf16.mxu0 0
    %1550 = vmatpush1.bf16.msra.mxu0 0
    %1551 = vmatprep.subr.bf16.mxu0 0
    %1552 = vmatpush1.bf16.msra.mxu0 0
    %1553 = vmatprep.subr.bf16.mxu0 0
    %1554 = vmatpush1.bf16.msra.mxu0 0
    %1555 = vmatprep.subr.bf16.mxu0 0
    %1556 = vmatpush1.bf16.msra.mxu0 0
    %1557 = vmatprep.subr.bf16.mxu0 0
    %1558 = vmatpush1.bf16.msra.mxu0 0
    %1559 = vmatprep.subr.bf16.mxu0 0
    %1560 = vmatpush1.bf16.msra.mxu0 0
    %1561 = vmatprep.mubr.bf16.mxu0 0
    %1562 = vmatmul.mubr.bf16.gmra.mrb[0].mxu0 %v1295
    %v1563 = vpop.f32.mrb[0].mxu0
    %v1564 = vadd.f32 0.0, %v1563
    %v1565 = vpop.f32.mrb[0].mxu0
    %v1566 = vadd.f32 0.0, %v1565
    %v1567 = vpop.f32.mrb[0].mxu0
    %v1568 = vpop.f32.mrb[0].mxu0
    %1569 = vdwg.mxu0
    %v1570 = vadd.f32 %v1291, %v1523
    %v1571 = vadd.f32 %v1292, %v1525
    %v1572 = vadd.f32 %v1293, %v1564
    %v1573 = vadd.f32 %v1294, %v1566
    %v1574 = vxor.u32 %v1570, 2147483648
    %v1575 = vmul.f32 %v1574, 1.442695
    %v1576 = vpow.pop %v1575
    %v1577 = vadd.f32 %v1576, 1.0
    %v1578 = vrcp.pop %v1577
    %v1579 = vmul.f32 1.0, %v1578
    %v1580 = vxor.u32 %v1571, 2147483648
    %v1581 = vmul.f32 %v1580, 1.442695
    %v1582 = vpow.pop %v1581
    %v1583 = vadd.f32 %v1582, 1.0
    %v1584 = vrcp.pop %v1583
    %v1585 = vmul.f32 1.0, %v1584
    %v1586 = vtanh.pop %v1572
    %v1587 = vxor.u32 %v1573, 2147483648
    %v1588 = vmul.f32 %v1587, 1.442695
    %v1589 = vpow.pop %v1588
    %v1590 = vadd.f32 %v1589, 1.0
    %v1591 = vrcp.pop %v1590
    %v1592 = vmul.f32 1.0, %v1591
    %v1593 = vmul.f32 %v1585, %v1286
    %v1594 = vmul.f32 %v1579, %v1586
    %v1595 = vadd.f32 %v1593, %v1594
    %v1596 = vtanh.pop %v1595
    %v1597 = vmul.f32 %v1592, %v1596
    %s1598 = scalar_lea.vmem [#allocation11], 32
    %1599 = vst [vmem:[%s1598] sm:$0xff] %v1597
    %v1600 = vld [vmem:[#allocation4 + $0xa0] sm:$0xff]
    %v1601 = vld [vmem:[#allocation4 + $0xa8] sm:$0xff]
    %v1602 = vld [vmem:[#allocation4 + $0xb0] sm:$0xff]
    %v1603 = vld [vmem:[#allocation4 + $0xb8] sm:$0xff]
    %v1604 = vpack.c.bf16 %v1597, %v1597
    %v1605 = vld [vmem:[#allocation10] sm:$0xff]
    %v1606 = vld [vmem:[#allocation10 + $0x8] sm:$0xff]
    %v1607 = vld [vmem:[#allocation10 + $0x10] sm:$0xff]
    %v1608 = vld [vmem:[#allocation10 + $0x18] sm:$0xff]
    %v1609 = vld [vmem:[#allocation10 + $0x20] sm:$0xff]
    %v1610 = vld [vmem:[#allocation10 + $0x28] sm:$0xff]
    %v1611 = vld [vmem:[#allocation10 + $0x30] sm:$0xff]
    %v1612 = vld [vmem:[#allocation10 + $0x38] sm:$0xff]
    %v1613 = vld [vmem:[#allocation10 + $0x40] sm:$0xff]
    %v1614 = vld [vmem:[#allocation10 + $0x48] sm:$0xff]
    %v1615 = vld [vmem:[#allocation10 + $0x50] sm:$0xff]
    %v1616 = vld [vmem:[#allocation10 + $0x58] sm:$0xff]
    %v1617 = vld [vmem:[#allocation10 + $0x60] sm:$0xff]
    %v1618 = vld [vmem:[#allocation10 + $0x68] sm:$0xff]
    %v1619 = vld [vmem:[#allocation10 + $0x70] sm:$0xff]
    %v1620 = vld [vmem:[#allocation10 + $0x78] sm:$0xff]
    %v1621 = vld [vmem:[#allocation10 + $0x80] sm:$0xff]
    %v1622 = vld [vmem:[#allocation10 + $0x88] sm:$0xff]
    %v1623 = vld [vmem:[#allocation10 + $0x90] sm:$0xff]
    %v1624 = vld [vmem:[#allocation10 + $0x98] sm:$0xff]
    %v1625 = vld [vmem:[#allocation10 + $0xa0] sm:$0xff]
    %v1626 = vld [vmem:[#allocation10 + $0xa8] sm:$0xff]
    %v1627 = vld [vmem:[#allocation10 + $0xb0] sm:$0xff]
    %v1628 = vld [vmem:[#allocation10 + $0xb8] sm:$0xff]
    %v1629 = vld [vmem:[#allocation10 + $0xc0] sm:$0xff]
    %v1630 = vld [vmem:[#allocation10 + $0xc8] sm:$0xff]
    %v1631 = vld [vmem:[#allocation10 + $0xd0] sm:$0xff]
    %v1632 = vld [vmem:[#allocation10 + $0xd8] sm:$0xff]
    %v1633 = vld [vmem:[#allocation10 + $0xe0] sm:$0xff]
    %v1634 = vld [vmem:[#allocation10 + $0xe8] sm:$0xff]
    %v1635 = vld [vmem:[#allocation10 + $0xf0] sm:$0xff]
    %v1636 = vld [vmem:[#allocation10 + $0xf8] sm:$0xff]
    %v1669 = vunpack.c.l.b16 %v1605
    %v1670 = vunpack.c.h.b16 %v1605
    %v1671 = vunpack.c.l.b16 %v1606
    %v1672 = vunpack.c.h.b16 %v1606
    %v1673 = vunpack.c.l.b16 %v1607
    %v1674 = vunpack.c.h.b16 %v1607
    %v1675 = vunpack.c.l.b16 %v1608
    %v1676 = vunpack.c.h.b16 %v1608
    %v1677 = vunpack.c.l.b16 %v1609
    %v1678 = vunpack.c.h.b16 %v1609
    %v1679 = vunpack.c.l.b16 %v1610
    %v1680 = vunpack.c.h.b16 %v1610
    %v1681 = vunpack.c.l.b16 %v1611
    %v1682 = vunpack.c.h.b16 %v1611
    %v1683 = vunpack.c.l.b16 %v1612
    %v1684 = vunpack.c.h.b16 %v1612
    %v1685 = vunpack.c.l.b16 %v1613
    %v1686 = vunpack.c.h.b16 %v1613
    %v1687 = vunpack.c.l.b16 %v1614
    %v1688 = vunpack.c.h.b16 %v1614
    %v1689 = vunpack.c.l.b16 %v1615
    %v1690 = vunpack.c.h.b16 %v1615
    %v1691 = vunpack.c.l.b16 %v1616
    %v1692 = vunpack.c.h.b16 %v1616
    %v1693 = vunpack.c.l.b16 %v1617
    %v1694 = vunpack.c.h.b16 %v1617
    %v1695 = vunpack.c.l.b16 %v1618
    %v1696 = vunpack.c.h.b16 %v1618
    %v1697 = vunpack.c.l.b16 %v1619
    %v1698 = vunpack.c.h.b16 %v1619
    %v1699 = vunpack.c.l.b16 %v1620
    %v1700 = vunpack.c.h.b16 %v1620
    %v1701 = vunpack.c.l.b16 %v1621
    %v1702 = vunpack.c.h.b16 %v1621
    %v1703 = vunpack.c.l.b16 %v1622
    %v1704 = vunpack.c.h.b16 %v1622
    %v1705 = vunpack.c.l.b16 %v1623
    %v1706 = vunpack.c.h.b16 %v1623
    %v1707 = vunpack.c.l.b16 %v1624
    %v1708 = vunpack.c.h.b16 %v1624
    %v1709 = vunpack.c.l.b16 %v1625
    %v1710 = vunpack.c.h.b16 %v1625
    %v1711 = vunpack.c.l.b16 %v1626
    %v1712 = vunpack.c.h.b16 %v1626
    %v1713 = vunpack.c.l.b16 %v1627
    %v1714 = vunpack.c.h.b16 %v1627
    %v1715 = vunpack.c.l.b16 %v1628
    %v1716 = vunpack.c.h.b16 %v1628
    %v1717 = vunpack.c.l.b16 %v1629
    %v1718 = vunpack.c.h.b16 %v1629
    %v1719 = vunpack.c.l.b16 %v1630
    %v1720 = vunpack.c.h.b16 %v1630
    %v1721 = vunpack.c.l.b16 %v1631
    %v1722 = vunpack.c.h.b16 %v1631
    %v1723 = vunpack.c.l.b16 %v1632
    %v1724 = vunpack.c.h.b16 %v1632
    %v1725 = vunpack.c.l.b16 %v1633
    %v1726 = vunpack.c.h.b16 %v1633
    %v1727 = vunpack.c.l.b16 %v1634
    %v1728 = vunpack.c.h.b16 %v1634
    %v1729 = vunpack.c.l.b16 %v1635
    %v1730 = vunpack.c.h.b16 %v1635
    %v1731 = vunpack.c.l.b16 %v1636
    %v1732 = vunpack.c.h.b16 %v1636
    %v1733 = vpack.c.b16 %v1673, %v1669
    %v1734 = vpack.c.b16 %v1674, %v1670
    %v1735 = vpack.c.b16 %v1675, %v1671
    %v1736 = vpack.c.b16 %v1676, %v1672
    %v1737 = vpack.c.b16 %v1681, %v1677
    %v1738 = vpack.c.b16 %v1682, %v1678
    %v1739 = vpack.c.b16 %v1683, %v1679
    %v1740 = vpack.c.b16 %v1684, %v1680
    %v1741 = vpack.c.b16 %v1689, %v1685
    %v1742 = vpack.c.b16 %v1690, %v1686
    %v1743 = vpack.c.b16 %v1691, %v1687
    %v1744 = vpack.c.b16 %v1692, %v1688
    %v1745 = vpack.c.b16 %v1697, %v1693
    %v1746 = vpack.c.b16 %v1698, %v1694
    %v1747 = vpack.c.b16 %v1699, %v1695
    %v1748 = vpack.c.b16 %v1700, %v1696
    %v1749 = vpack.c.b16 %v1705, %v1701
    %v1750 = vpack.c.b16 %v1706, %v1702
    %v1751 = vpack.c.b16 %v1707, %v1703
    %v1752 = vpack.c.b16 %v1708, %v1704
    %v1753 = vpack.c.b16 %v1713, %v1709
    %v1754 = vpack.c.b16 %v1714, %v1710
    %v1755 = vpack.c.b16 %v1715, %v1711
    %v1756 = vpack.c.b16 %v1716, %v1712
    %v1757 = vpack.c.b16 %v1721, %v1717
    %v1758 = vpack.c.b16 %v1722, %v1718
    %v1759 = vpack.c.b16 %v1723, %v1719
    %v1760 = vpack.c.b16 %v1724, %v1720
    %v1761 = vpack.c.b16 %v1729, %v1725
    %v1762 = vpack.c.b16 %v1730, %v1726
    %v1763 = vpack.c.b16 %v1731, %v1727
    %v1764 = vpack.c.b16 %v1732, %v1728
    %1797 = vmatprep.subr.bf16.mxu0 %v1734
    %1798 = vmatpush1.bf16.msra.mxu0 %v1733
    %1799 = vmatprep.subr.bf16.mxu0 %v1738
    %1800 = vmatpush1.bf16.msra.mxu0 %v1737
    %1801 = vmatprep.subr.bf16.mxu0 %v1742
    %1802 = vmatpush1.bf16.msra.mxu0 %v1741
    %1803 = vmatprep.subr.bf16.mxu0 %v1746
    %1804 = vmatpush1.bf16.msra.mxu0 %v1745
    %1805 = vmatprep.subr.bf16.mxu0 %v1750
    %1806 = vmatpush1.bf16.msra.mxu0 %v1749
    %1807 = vmatprep.subr.bf16.mxu0 %v1754
    %1808 = vmatpush1.bf16.msra.mxu0 %v1753
    %1809 = vmatprep.subr.bf16.mxu0 %v1758
    %1810 = vmatpush1.bf16.msra.mxu0 %v1757
    %1811 = vmatprep.subr.bf16.mxu0 %v1762
    %1812 = vmatpush1.bf16.msra.mxu0 %v1761
    %1813 = vmatprep.subr.bf16.mxu0 0
    %1814 = vmatpush1.bf16.msra.mxu0 0
    %1815 = vmatprep.subr.bf16.mxu0 0
    %1816 = vmatpush1.bf16.msra.mxu0 0
    %1817 = vmatprep.subr.bf16.mxu0 0
    %1818 = vmatpush1.bf16.msra.mxu0 0
    %1819 = vmatprep.subr.bf16.mxu0 0
    %1820 = vmatpush1.bf16.msra.mxu0 0
    %1821 = vmatprep.subr.bf16.mxu0 0
    %1822 = vmatpush1.bf16.msra.mxu0 0
    %1823 = vmatprep.subr.bf16.mxu0 0
    %1824 = vmatpush1.bf16.msra.mxu0 0
    %1825 = vmatprep.subr.bf16.mxu0 0
    %1826 = vmatpush1.bf16.msra.mxu0 0
    %1827 = vmatprep.subr.bf16.mxu0 0
    %1828 = vmatpush1.bf16.msra.mxu0 0
    %1829 = vmatprep.mubr.bf16.mxu0 0
    %1830 = vmatmul.mubr.bf16.gmra.mrb[0].mxu0 %v1604
    %v1831 = vpop.f32.mrb[0].mxu0
    %v1832 = vadd.f32 0.0, %v1831
    %v1833 = vpop.f32.mrb[0].mxu0
    %v1834 = vadd.f32 0.0, %v1833
    %v1835 = vpop.f32.mrb[0].mxu0
    %v1836 = vpop.f32.mrb[0].mxu0
    %1837 = vdwg.mxu0
    %1838 = vmatprep.subr.bf16.mxu0 %v1736
    %1839 = vmatpush1.bf16.msra.mxu0 %v1735
    %1840 = vmatprep.subr.bf16.mxu0 %v1740
    %1841 = vmatpush1.bf16.msra.mxu0 %v1739
    %1842 = vmatprep.subr.bf16.mxu0 %v1744
    %1843 = vmatpush1.bf16.msra.mxu0 %v1743
    %1844 = vmatprep.subr.bf16.mxu0 %v1748
    %1845 = vmatpush1.bf16.msra.mxu0 %v1747
    %1846 = vmatprep.subr.bf16.mxu0 %v1752
    %1847 = vmatpush1.bf16.msra.mxu0 %v1751
    %1848 = vmatprep.subr.bf16.mxu0 %v1756
    %1849 = vmatpush1.bf16.msra.mxu0 %v1755
    %1850 = vmatprep.subr.bf16.mxu0 %v1760
    %1851 = vmatpush1.bf16.msra.mxu0 %v1759
    %1852 = vmatprep.subr.bf16.mxu0 %v1764
    %1853 = vmatpush1.bf16.msra.mxu0 %v1763
    %1854 = vmatprep.subr.bf16.mxu0 0
    %1855 = vmatpush1.bf16.msra.mxu0 0
    %1856 = vmatprep.subr.bf16.mxu0 0
    %1857 = vmatpush1.bf16.msra.mxu0 0
    %1858 = vmatprep.subr.bf16.mxu0 0
    %1859 = vmatpush1.bf16.msra.mxu0 0
    %1860 = vmatprep.subr.bf16.mxu0 0
    %1861 = vmatpush1.bf16.msra.mxu0 0
    %1862 = vmatprep.subr.bf16.mxu0 0
    %1863 = vmatpush1.bf16.msra.mxu0 0
    %1864 = vmatprep.subr.bf16.mxu0 0
    %1865 = vmatpush1.bf16.msra.mxu0 0
    %1866 = vmatprep.subr.bf16.mxu0 0
    %1867 = vmatpush1.bf16.msra.mxu0 0
    %1868 = vmatprep.subr.bf16.mxu0 0
    %1869 = vmatpush1.bf16.msra.mxu0 0
    %1870 = vmatprep.mubr.bf16.mxu0 0
    %1871 = vmatmul.mubr.bf16.gmra.mrb[0].mxu0 %v1604
    %v1872 = vpop.f32.mrb[0].mxu0
    %v1873 = vadd.f32 0.0, %v1872
    %v1874 = vpop.f32.mrb[0].mxu0
    %v1875 = vadd.f32 0.0, %v1874
    %v1876 = vpop.f32.mrb[0].mxu0
    %v1877 = vpop.f32.mrb[0].mxu0
    %1878 = vdwg.mxu0
    %v1879 = vadd.f32 %v1600, %v1832
    %v1880 = vadd.f32 %v1601, %v1834
    %v1881 = vadd.f32 %v1602, %v1873
    %v1882 = vadd.f32 %v1603, %v1875
    %v1883 = vxor.u32 %v1879, 2147483648
    %v1884 = vmul.f32 %v1883, 1.442695
    %v1885 = vpow.pop %v1884
    %v1886 = vadd.f32 %v1885, 1.0
    %v1887 = vrcp.pop %v1886
    %v1888 = vmul.f32 1.0, %v1887
    %v1889 = vxor.u32 %v1880, 2147483648
    %v1890 = vmul.f32 %v1889, 1.442695
    %v1891 = vpow.pop %v1890
    %v1892 = vadd.f32 %v1891, 1.0
    %v1893 = vrcp.pop %v1892
    %v1894 = vmul.f32 1.0, %v1893
    %v1895 = vtanh.pop %v1881
    %v1896 = vxor.u32 %v1882, 2147483648
    %v1897 = vmul.f32 %v1896, 1.442695
    %v1898 = vpow.pop %v1897
    %v1899 = vadd.f32 %v1898, 1.0
    %v1900 = vrcp.pop %v1899
    %v1901 = vmul.f32 1.0, %v1900
    %v1902 = vmul.f32 %v1894, %v1595
    %v1903 = vmul.f32 %v1888, %v1895
    %v1904 = vadd.f32 %v1902, %v1903
    %v1905 = vtanh.pop %v1904
    %v1906 = vmul.f32 %v1901, %v1905
    %s1907 = scalar_lea.vmem [#allocation11], 40
    %1908 = vst [vmem:[%s1907] sm:$0xff] %v1906
    %v1909 = vld [vmem:[#allocation4 + $0xc0] sm:$0xff]
    %v1910 = vld [vmem:[#allocation4 + $0xc8] sm:$0xff]
    %v1911 = vld [vmem:[#allocation4 + $0xd0] sm:$0xff]
    %v1912 = vld [vmem:[#allocation4 + $0xd8] sm:$0xff]
    %v1913 = vpack.c.bf16 %v1906, %v1906
    %v1914 = vld [vmem:[#allocation10] sm:$0xff]
    %v1915 = vld [vmem:[#allocation10 + $0x8] sm:$0xff]
    %v1916 = vld [vmem:[#allocation10 + $0x10] sm:$0xff]
    %v1917 = vld [vmem:[#allocation10 + $0x18] sm:$0xff]
    %v1918 = vld [vmem:[#allocation10 + $0x20] sm:$0xff]
    %v1919 = vld [vmem:[#allocation10 + $0x28] sm:$0xff]
    %v1920 = vld [vmem:[#allocation10 + $0x30] sm:$0xff]
    %v1921 = vld [vmem:[#allocation10 + $0x38] sm:$0xff]
    %v1922 = vld [vmem:[#allocation10 + $0x40] sm:$0xff]
    %v1923 = vld [vmem:[#allocation10 + $0x48] sm:$0xff]
    %v1924 = vld [vmem:[#allocation10 + $0x50] sm:$0xff]
    %v1925 = vld [vmem:[#allocation10 + $0x58] sm:$0xff]
    %v1926 = vld [vmem:[#allocation10 + $0x60] sm:$0xff]
    %v1927 = vld [vmem:[#allocation10 + $0x68] sm:$0xff]
    %v1928 = vld [vmem:[#allocation10 + $0x70] sm:$0xff]
    %v1929 = vld [vmem:[#allocation10 + $0x78] sm:$0xff]
    %v1930 = vld [vmem:[#allocation10 + $0x80] sm:$0xff]
    %v1931 = vld [vmem:[#allocation10 + $0x88] sm:$0xff]
    %v1932 = vld [vmem:[#allocation10 + $0x90] sm:$0xff]
    %v1933 = vld [vmem:[#allocation10 + $0x98] sm:$0xff]
    %v1934 = vld [vmem:[#allocation10 + $0xa0] sm:$0xff]
    %v1935 = vld [vmem:[#allocation10 + $0xa8] sm:$0xff]
    %v1936 = vld [vmem:[#allocation10 + $0xb0] sm:$0xff]
    %v1937 = vld [vmem:[#allocation10 + $0xb8] sm:$0xff]
    %v1938 = vld [vmem:[#allocation10 + $0xc0] sm:$0xff]
    %v1939 = vld [vmem:[#allocation10 + $0xc8] sm:$0xff]
    %v1940 = vld [vmem:[#allocation10 + $0xd0] sm:$0xff]
    %v1941 = vld [vmem:[#allocation10 + $0xd8] sm:$0xff]
    %v1942 = vld [vmem:[#allocation10 + $0xe0] sm:$0xff]
    %v1943 = vld [vmem:[#allocation10 + $0xe8] sm:$0xff]
    %v1944 = vld [vmem:[#allocation10 + $0xf0] sm:$0xff]
    %v1945 = vld [vmem:[#allocation10 + $0xf8] sm:$0xff]
    %v1978 = vunpack.c.l.b16 %v1914
    %v1979 = vunpack.c.h.b16 %v1914
    %v1980 = vunpack.c.l.b16 %v1915
    %v1981 = vunpack.c.h.b16 %v1915
    %v1982 = vunpack.c.l.b16 %v1916
    %v1983 = vunpack.c.h.b16 %v1916
    %v1984 = vunpack.c.l.b16 %v1917
    %v1985 = vunpack.c.h.b16 %v1917
    %v1986 = vunpack.c.l.b16 %v1918
    %v1987 = vunpack.c.h.b16 %v1918
    %v1988 = vunpack.c.l.b16 %v1919
    %v1989 = vunpack.c.h.b16 %v1919
    %v1990 = vunpack.c.l.b16 %v1920
    %v1991 = vunpack.c.h.b16 %v1920
    %v1992 = vunpack.c.l.b16 %v1921
    %v1993 = vunpack.c.h.b16 %v1921
    %v1994 = vunpack.c.l.b16 %v1922
    %v1995 = vunpack.c.h.b16 %v1922
    %v1996 = vunpack.c.l.b16 %v1923
    %v1997 = vunpack.c.h.b16 %v1923
    %v1998 = vunpack.c.l.b16 %v1924
    %v1999 = vunpack.c.h.b16 %v1924
    %v2000 = vunpack.c.l.b16 %v1925
    %v2001 = vunpack.c.h.b16 %v1925
    %v2002 = vunpack.c.l.b16 %v1926
    %v2003 = vunpack.c.h.b16 %v1926
    %v2004 = vunpack.c.l.b16 %v1927
    %v2005 = vunpack.c.h.b16 %v1927
    %v2006 = vunpack.c.l.b16 %v1928
    %v2007 = vunpack.c.h.b16 %v1928
    %v2008 = vunpack.c.l.b16 %v1929
    %v2009 = vunpack.c.h.b16 %v1929
    %v2010 = vunpack.c.l.b16 %v1930
    %v2011 = vunpack.c.h.b16 %v1930
    %v2012 = vunpack.c.l.b16 %v1931
    %v2013 = vunpack.c.h.b16 %v1931
    %v2014 = vunpack.c.l.b16 %v1932
    %v2015 = vunpack.c.h.b16 %v1932
    %v2016 = vunpack.c.l.b16 %v1933
    %v2017 = vunpack.c.h.b16 %v1933
    %v2018 = vunpack.c.l.b16 %v1934
    %v2019 = vunpack.c.h.b16 %v1934
    %v2020 = vunpack.c.l.b16 %v1935
    %v2021 = vunpack.c.h.b16 %v1935
    %v2022 = vunpack.c.l.b16 %v1936
    %v2023 = vunpack.c.h.b16 %v1936
    %v2024 = vunpack.c.l.b16 %v1937
    %v2025 = vunpack.c.h.b16 %v1937
    %v2026 = vunpack.c.l.b16 %v1938
    %v2027 = vunpack.c.h.b16 %v1938
    %v2028 = vunpack.c.l.b16 %v1939
    %v2029 = vunpack.c.h.b16 %v1939
    %v2030 = vunpack.c.l.b16 %v1940
    %v2031 = vunpack.c.h.b16 %v1940
    %v2032 = vunpack.c.l.b16 %v1941
    %v2033 = vunpack.c.h.b16 %v1941
    %v2034 = vunpack.c.l.b16 %v1942
    %v2035 = vunpack.c.h.b16 %v1942
    %v2036 = vunpack.c.l.b16 %v1943
    %v2037 = vunpack.c.h.b16 %v1943
    %v2038 = vunpack.c.l.b16 %v1944
    %v2039 = vunpack.c.h.b16 %v1944
    %v2040 = vunpack.c.l.b16 %v1945
    %v2041 = vunpack.c.h.b16 %v1945
    %v2042 = vpack.c.b16 %v1982, %v1978
    %v2043 = vpack.c.b16 %v1983, %v1979
    %v2044 = vpack.c.b16 %v1984, %v1980
    %v2045 = vpack.c.b16 %v1985, %v1981
    %v2046 = vpack.c.b16 %v1990, %v1986
    %v2047 = vpack.c.b16 %v1991, %v1987
    %v2048 = vpack.c.b16 %v1992, %v1988
    %v2049 = vpack.c.b16 %v1993, %v1989
    %v2050 = vpack.c.b16 %v1998, %v1994
    %v2051 = vpack.c.b16 %v1999, %v1995
    %v2052 = vpack.c.b16 %v2000, %v1996
    %v2053 = vpack.c.b16 %v2001, %v1997
    %v2054 = vpack.c.b16 %v2006, %v2002
    %v2055 = vpack.c.b16 %v2007, %v2003
    %v2056 = vpack.c.b16 %v2008, %v2004
    %v2057 = vpack.c.b16 %v2009, %v2005
    %v2058 = vpack.c.b16 %v2014, %v2010
    %v2059 = vpack.c.b16 %v2015, %v2011
    %v2060 = vpack.c.b16 %v2016, %v2012
    %v2061 = vpack.c.b16 %v2017, %v2013
    %v2062 = vpack.c.b16 %v2022, %v2018
    %v2063 = vpack.c.b16 %v2023, %v2019
    %v2064 = vpack.c.b16 %v2024, %v2020
    %v2065 = vpack.c.b16 %v2025, %v2021
    %v2066 = vpack.c.b16 %v2030, %v2026
    %v2067 = vpack.c.b16 %v2031, %v2027
    %v2068 = vpack.c.b16 %v2032, %v2028
    %v2069 = vpack.c.b16 %v2033, %v2029
    %v2070 = vpack.c.b16 %v2038, %v2034
    %v2071 = vpack.c.b16 %v2039, %v2035
    %v2072 = vpack.c.b16 %v2040, %v2036
    %v2073 = vpack.c.b16 %v2041, %v2037
    %2106 = vmatprep.subr.bf16.mxu0 %v2043
    %2107 = vmatpush1.bf16.msra.mxu0 %v2042
    %2108 = vmatprep.subr.bf16.mxu0 %v2047
    %2109 = vmatpush1.bf16.msra.mxu0 %v2046
    %2110 = vmatprep.subr.bf16.mxu0 %v2051
    %2111 = vmatpush1.bf16.msra.mxu0 %v2050
    %2112 = vmatprep.subr.bf16.mxu0 %v2055
    %2113 = vmatpush1.bf16.msra.mxu0 %v2054
    %2114 = vmatprep.subr.bf16.mxu0 %v2059
    %2115 = vmatpush1.bf16.msra.mxu0 %v2058
    %2116 = vmatprep.subr.bf16.mxu0 %v2063
    %2117 = vmatpush1.bf16.msra.mxu0 %v2062
    %2118 = vmatprep.subr.bf16.mxu0 %v2067
    %2119 = vmatpush1.bf16.msra.mxu0 %v2066
    %2120 = vmatprep.subr.bf16.mxu0 %v2071
    %2121 = vmatpush1.bf16.msra.mxu0 %v2070
    %2122 = vmatprep.subr.bf16.mxu0 0
    %2123 = vmatpush1.bf16.msra.mxu0 0
    %2124 = vmatprep.subr.bf16.mxu0 0
    %2125 = vmatpush1.bf16.msra.mxu0 0
    %2126 = vmatprep.subr.bf16.mxu0 0
    %2127 = vmatpush1.bf16.msra.mxu0 0
    %2128 = vmatprep.subr.bf16.mxu0 0
    %2129 = vmatpush1.bf16.msra.mxu0 0
    %2130 = vmatprep.subr.bf16.mxu0 0
    %2131 = vmatpush1.bf16.msra.mxu0 0
    %2132 = vmatprep.subr.bf16.mxu0 0
    %2133 = vmatpush1.bf16.msra.mxu0 0
    %2134 = vmatprep.subr.bf16.mxu0 0
    %2135 = vmatpush1.bf16.msra.mxu0 0
    %2136 = vmatprep.subr.bf16.mxu0 0
    %2137 = vmatpush1.bf16.msra.mxu0 0
    %2138 = vmatprep.mubr.bf16.mxu0 0
    %2139 = vmatmul.mubr.bf16.gmra.mrb[0].mxu0 %v1913
    %v2140 = vpop.f32.mrb[0].mxu0
    %v2141 = vadd.f32 0.0, %v2140
    %v2142 = vpop.f32.mrb[0].mxu0
    %v2143 = vadd.f32 0.0, %v2142
    %v2144 = vpop.f32.mrb[0].mxu0
    %v2145 = vpop.f32.mrb[0].mxu0
    %2146 = vdwg.mxu0
    %2147 = vmatprep.subr.bf16.mxu0 %v2045
    %2148 = vmatpush1.bf16.msra.mxu0 %v2044
    %2149 = vmatprep.subr.bf16.mxu0 %v2049
    %2150 = vmatpush1.bf16.msra.mxu0 %v2048
    %2151 = vmatprep.subr.bf16.mxu0 %v2053
    %2152 = vmatpush1.bf16.msra.mxu0 %v2052
    %2153 = vmatprep.subr.bf16.mxu0 %v2057
    %2154 = vmatpush1.bf16.msra.mxu0 %v2056
    %2155 = vmatprep.subr.bf16.mxu0 %v2061
    %2156 = vmatpush1.bf16.msra.mxu0 %v2060
    %2157 = vmatprep.subr.bf16.mxu0 %v2065
    %2158 = vmatpush1.bf16.msra.mxu0 %v2064
    %2159 = vmatprep.subr.bf16.mxu0 %v2069
    %2160 = vmatpush1.bf16.msra.mxu0 %v2068
    %2161 = vmatprep.subr.bf16.mxu0 %v2073
    %2162 = vmatpush1.bf16.msra.mxu0 %v2072
    %2163 = vmatprep.subr.bf16.mxu0 0
    %2164 = vmatpush1.bf16.msra.mxu0 0
    %2165 = vmatprep.subr.bf16.mxu0 0
    %2166 = vmatpush1.bf16.msra.mxu0 0
    %2167 = vmatprep.subr.bf16.mxu0 0
    %2168 = vmatpush1.bf16.msra.mxu0 0
    %2169 = vmatprep.subr.bf16.mxu0 0
    %2170 = vmatpush1.bf16.msra.mxu0 0
    %2171 = vmatprep.subr.bf16.mxu0 0
    %2172 = vmatpush1.bf16.msra.mxu0 0
    %2173 = vmatprep.subr.bf16.mxu0 0
    %2174 = vmatpush1.bf16.msra.mxu0 0
    %2175 = vmatprep.subr.bf16.mxu0 0
    %2176 = vmatpush1.bf16.msra.mxu0 0
    %2177 = vmatprep.subr.bf16.mxu0 0
    %2178 = vmatpush1.bf16.msra.mxu0 0
    %2179 = vmatprep.mubr.bf16.mxu0 0
    %2180 = vmatmul.mubr.bf16.gmra.mrb[0].mxu0 %v1913
    %v2181 = vpop.f32.mrb[0].mxu0
    %v2182 = vadd.f32 0.0, %v2181
    %v2183 = vpop.f32.mrb[0].mxu0
    %v2184 = vadd.f32 0.0, %v2183
    %v2185 = vpop.f32.mrb[0].mxu0
    %v2186 = vpop.f32.mrb[0].mxu0
    %2187 = vdwg.mxu0
    %v2188 = vadd.f32 %v1909, %v2141
    %v2189 = vadd.f32 %v1910, %v2143
    %v2190 = vadd.f32 %v1911, %v2182
    %v2191 = vadd.f32 %v1912, %v2184
    %v2192 = vxor.u32 %v2188, 2147483648
    %v2193 = vmul.f32 %v2192, 1.442695
    %v2194 = vpow.pop %v2193
    %v2195 = vadd.f32 %v2194, 1.0
    %v2196 = vrcp.pop %v2195
    %v2197 = vmul.f32 1.0, %v2196
    %v2198 = vxor.u32 %v2189, 2147483648
    %v2199 = vmul.f32 %v2198, 1.442695
    %v2200 = vpow.pop %v2199
    %v2201 = vadd.f32 %v2200, 1.0
    %v2202 = vrcp.pop %v2201
    %v2203 = vmul.f32 1.0, %v2202
    %v2204 = vtanh.pop %v2190
    %v2205 = vxor.u32 %v2191, 2147483648
    %v2206 = vmul.f32 %v2205, 1.442695
    %v2207 = vpow.pop %v2206
    %v2208 = vadd.f32 %v2207, 1.0
    %v2209 = vrcp.pop %v2208
    %v2210 = vmul.f32 1.0, %v2209
    %v2211 = vmul.f32 %v2203, %v1904
    %v2212 = vmul.f32 %v2197, %v2204
    %v2213 = vadd.f32 %v2211, %v2212
    %v2214 = vtanh.pop %v2213
    %v2215 = vmul.f32 %v2210, %v2214
    %s2216 = scalar_lea.vmem [#allocation11], 48
    %2217 = vst [vmem:[%s2216] sm:$0xff] %v2215
    %v2218 = vld [vmem:[#allocation4 + $0xe0] sm:$0xff]
    %v2219 = vld [vmem:[#allocation4 + $0xe8] sm:$0xff]
    %v2220 = vld [vmem:[#allocation4 + $0xf0] sm:$0xff]
    %v2221 = vld [vmem:[#allocation4 + $0xf8] sm:$0xff]
    %v2222 = vpack.c.bf16 %v2215, %v2215
    %v2223 = vld [vmem:[#allocation10] sm:$0xff]
    %v2224 = vld [vmem:[#allocation10 + $0x8] sm:$0xff]
    %v2225 = vld [vmem:[#allocation10 + $0x10] sm:$0xff]
    %v2226 = vld [vmem:[#allocation10 + $0x18] sm:$0xff]
    %v2227 = vld [vmem:[#allocation10 + $0x20] sm:$0xff]
    %v2228 = vld [vmem:[#allocation10 + $0x28] sm:$0xff]
    %v2229 = vld [vmem:[#allocation10 + $0x30] sm:$0xff]
    %v2230 = vld [vmem:[#allocation10 + $0x38] sm:$0xff]
    %v2231 = vld [vmem:[#allocation10 + $0x40] sm:$0xff]
    %v2232 = vld [vmem:[#allocation10 + $0x48] sm:$0xff]
    %v2233 = vld [vmem:[#allocation10 + $0x50] sm:$0xff]
    %v2234 = vld [vmem:[#allocation10 + $0x58] sm:$0xff]
    %v2235 = vld [vmem:[#allocation10 + $0x60] sm:$0xff]
    %v2236 = vld [vmem:[#allocation10 + $0x68] sm:$0xff]
    %v2237 = vld [vmem:[#allocation10 + $0x70] sm:$0xff]
    %v2238 = vld [vmem:[#allocation10 + $0x78] sm:$0xff]
    %v2239 = vld [vmem:[#allocation10 + $0x80] sm:$0xff]
    %v2240 = vld [vmem:[#allocation10 + $0x88] sm:$0xff]
    %v2241 = vld [vmem:[#allocation10 + $0x90] sm:$0xff]
    %v2242 = vld [vmem:[#allocation10 + $0x98] sm:$0xff]
    %v2243 = vld [vmem:[#allocation10 + $0xa0] sm:$0xff]
    %v2244 = vld [vmem:[#allocation10 + $0xa8] sm:$0xff]
    %v2245 = vld [vmem:[#allocation10 + $0xb0] sm:$0xff]
    %v2246 = vld [vmem:[#allocation10 + $0xb8] sm:$0xff]
    %v2247 = vld [vmem:[#allocation10 + $0xc0] sm:$0xff]
    %v2248 = vld [vmem:[#allocation10 + $0xc8] sm:$0xff]
    %v2249 = vld [vmem:[#allocation10 + $0xd0] sm:$0xff]
    %v2250 = vld [vmem:[#allocation10 + $0xd8] sm:$0xff]
    %v2251 = vld [vmem:[#allocation10 + $0xe0] sm:$0xff]
    %v2252 = vld [vmem:[#allocation10 + $0xe8] sm:$0xff]
    %v2253 = vld [vmem:[#allocation10 + $0xf0] sm:$0xff]
    %v2254 = vld [vmem:[#allocation10 + $0xf8] sm:$0xff]
    %v2287 = vunpack.c.l.b16 %v2223
    %v2288 = vunpack.c.h.b16 %v2223
    %v2289 = vunpack.c.l.b16 %v2224
    %v2290 = vunpack.c.h.b16 %v2224
    %v2291 = vunpack.c.l.b16 %v2225
    %v2292 = vunpack.c.h.b16 %v2225
    %v2293 = vunpack.c.l.b16 %v2226
    %v2294 = vunpack.c.h.b16 %v2226
    %v2295 = vunpack.c.l.b16 %v2227
    %v2296 = vunpack.c.h.b16 %v2227
    %v2297 = vunpack.c.l.b16 %v2228
    %v2298 = vunpack.c.h.b16 %v2228
    %v2299 = vunpack.c.l.b16 %v2229
    %v2300 = vunpack.c.h.b16 %v2229
    %v2301 = vunpack.c.l.b16 %v2230
    %v2302 = vunpack.c.h.b16 %v2230
    %v2303 = vunpack.c.l.b16 %v2231
    %v2304 = vunpack.c.h.b16 %v2231
    %v2305 = vunpack.c.l.b16 %v2232
    %v2306 = vunpack.c.h.b16 %v2232
    %v2307 = vunpack.c.l.b16 %v2233
    %v2308 = vunpack.c.h.b16 %v2233
    %v2309 = vunpack.c.l.b16 %v2234
    %v2310 = vunpack.c.h.b16 %v2234
    %v2311 = vunpack.c.l.b16 %v2235
    %v2312 = vunpack.c.h.b16 %v2235
    %v2313 = vunpack.c.l.b16 %v2236
    %v2314 = vunpack.c.h.b16 %v2236
    %v2315 = vunpack.c.l.b16 %v2237
    %v2316 = vunpack.c.h.b16 %v2237
    %v2317 = vunpack.c.l.b16 %v2238
    %v2318 = vunpack.c.h.b16 %v2238
    %v2319 = vunpack.c.l.b16 %v2239
    %v2320 = vunpack.c.h.b16 %v2239
    %v2321 = vunpack.c.l.b16 %v2240
    %v2322 = vunpack.c.h.b16 %v2240
    %v2323 = vunpack.c.l.b16 %v2241
    %v2324 = vunpack.c.h.b16 %v2241
    %v2325 = vunpack.c.l.b16 %v2242
    %v2326 = vunpack.c.h.b16 %v2242
    %v2327 = vunpack.c.l.b16 %v2243
    %v2328 = vunpack.c.h.b16 %v2243
    %v2329 = vunpack.c.l.b16 %v2244
    %v2330 = vunpack.c.h.b16 %v2244
    %v2331 = vunpack.c.l.b16 %v2245
    %v2332 = vunpack.c.h.b16 %v2245
    %v2333 = vunpack.c.l.b16 %v2246
    %v2334 = vunpack.c.h.b16 %v2246
    %v2335 = vunpack.c.l.b16 %v2247
    %v2336 = vunpack.c.h.b16 %v2247
    %v2337 = vunpack.c.l.b16 %v2248
    %v2338 = vunpack.c.h.b16 %v2248
    %v2339 = vunpack.c.l.b16 %v2249
    %v2340 = vunpack.c.h.b16 %v2249
    %v2341 = vunpack.c.l.b16 %v2250
    %v2342 = vunpack.c.h.b16 %v2250
    %v2343 = vunpack.c.l.b16 %v2251
    %v2344 = vunpack.c.h.b16 %v2251
    %v2345 = vunpack.c.l.b16 %v2252
    %v2346 = vunpack.c.h.b16 %v2252
    %v2347 = vunpack.c.l.b16 %v2253
    %v2348 = vunpack.c.h.b16 %v2253
    %v2349 = vunpack.c.l.b16 %v2254
    %v2350 = vunpack.c.h.b16 %v2254
    %v2351 = vpack.c.b16 %v2291, %v2287
    %v2352 = vpack.c.b16 %v2292, %v2288
    %v2353 = vpack.c.b16 %v2293, %v2289
    %v2354 = vpack.c.b16 %v2294, %v2290
    %v2355 = vpack.c.b16 %v2299, %v2295
    %v2356 = vpack.c.b16 %v2300, %v2296
    %v2357 = vpack.c.b16 %v2301, %v2297
    %v2358 = vpack.c.b16 %v2302, %v2298
    %v2359 = vpack.c.b16 %v2307, %v2303
    %v2360 = vpack.c.b16 %v2308, %v2304
    %v2361 = vpack.c.b16 %v2309, %v2305
    %v2362 = vpack.c.b16 %v2310, %v2306
    %v2363 = vpack.c.b16 %v2315, %v2311
    %v2364 = vpack.c.b16 %v2316, %v2312
    %v2365 = vpack.c.b16 %v2317, %v2313
    %v2366 = vpack.c.b16 %v2318, %v2314
    %v2367 = vpack.c.b16 %v2323, %v2319
    %v2368 = vpack.c.b16 %v2324, %v2320
    %v2369 = vpack.c.b16 %v2325, %v2321
    %v2370 = vpack.c.b16 %v2326, %v2322
    %v2371 = vpack.c.b16 %v2331, %v2327
    %v2372 = vpack.c.b16 %v2332, %v2328
    %v2373 = vpack.c.b16 %v2333, %v2329
    %v2374 = vpack.c.b16 %v2334, %v2330
    %v2375 = vpack.c.b16 %v2339, %v2335
    %v2376 = vpack.c.b16 %v2340, %v2336
    %v2377 = vpack.c.b16 %v2341, %v2337
    %v2378 = vpack.c.b16 %v2342, %v2338
    %v2379 = vpack.c.b16 %v2347, %v2343
    %v2380 = vpack.c.b16 %v2348, %v2344
    %v2381 = vpack.c.b16 %v2349, %v2345
    %v2382 = vpack.c.b16 %v2350, %v2346
    %2415 = vmatprep.subr.bf16.mxu0 %v2352
    %2416 = vmatpush1.bf16.msra.mxu0 %v2351
    %2417 = vmatprep.subr.bf16.mxu0 %v2356
    %2418 = vmatpush1.bf16.msra.mxu0 %v2355
    %2419 = vmatprep.subr.bf16.mxu0 %v2360
    %2420 = vmatpush1.bf16.msra.mxu0 %v2359
    %2421 = vmatprep.subr.bf16.mxu0 %v2364
    %2422 = vmatpush1.bf16.msra.mxu0 %v2363
    %2423 = vmatprep.subr.bf16.mxu0 %v2368
    %2424 = vmatpush1.bf16.msra.mxu0 %v2367
    %2425 = vmatprep.subr.bf16.mxu0 %v2372
    %2426 = vmatpush1.bf16.msra.mxu0 %v2371
    %2427 = vmatprep.subr.bf16.mxu0 %v2376
    %2428 = vmatpush1.bf16.msra.mxu0 %v2375
    %2429 = vmatprep.subr.bf16.mxu0 %v2380
    %2430 = vmatpush1.bf16.msra.mxu0 %v2379
    %2431 = vmatprep.subr.bf16.mxu0 0
    %2432 = vmatpush1.bf16.msra.mxu0 0
    %2433 = vmatprep.subr.bf16.mxu0 0
    %2434 = vmatpush1.bf16.msra.mxu0 0
    %2435 = vmatprep.subr.bf16.mxu0 0
    %2436 = vmatpush1.bf16.msra.mxu0 0
    %2437 = vmatprep.subr.bf16.mxu0 0
    %2438 = vmatpush1.bf16.msra.mxu0 0
    %2439 = vmatprep.subr.bf16.mxu0 0
    %2440 = vmatpush1.bf16.msra.mxu0 0
    %2441 = vmatprep.subr.bf16.mxu0 0
    %2442 = vmatpush1.bf16.msra.mxu0 0
    %2443 = vmatprep.subr.bf16.mxu0 0
    %2444 = vmatpush1.bf16.msra.mxu0 0
    %2445 = vmatprep.subr.bf16.mxu0 0
    %2446 = vmatpush1.bf16.msra.mxu0 0
    %2447 = vmatprep.mubr.bf16.mxu0 0
    %2448 = vmatmul.mubr.bf16.gmra.mrb[0].mxu0 %v2222
    %v2449 = vpop.f32.mrb[0].mxu0
    %v2450 = vadd.f32 0.0, %v2449
    %v2451 = vpop.f32.mrb[0].mxu0
    %v2452 = vadd.f32 0.0, %v2451
    %v2453 = vpop.f32.mrb[0].mxu0
    %v2454 = vpop.f32.mrb[0].mxu0
    %2455 = vdwg.mxu0
    %2456 = vmatprep.subr.bf16.mxu0 %v2354
    %2457 = vmatpush1.bf16.msra.mxu0 %v2353
    %2458 = vmatprep.subr.bf16.mxu0 %v2358
    %2459 = vmatpush1.bf16.msra.mxu0 %v2357
    %2460 = vmatprep.subr.bf16.mxu0 %v2362
    %2461 = vmatpush1.bf16.msra.mxu0 %v2361
    %2462 = vmatprep.subr.bf16.mxu0 %v2366
    %2463 = vmatpush1.bf16.msra.mxu0 %v2365
    %2464 = vmatprep.subr.bf16.mxu0 %v2370
    %2465 = vmatpush1.bf16.msra.mxu0 %v2369
    %2466 = vmatprep.subr.bf16.mxu0 %v2374
    %2467 = vmatpush1.bf16.msra.mxu0 %v2373
    %2468 = vmatprep.subr.bf16.mxu0 %v2378
    %2469 = vmatpush1.bf16.msra.mxu0 %v2377
    %2470 = vmatprep.subr.bf16.mxu0 %v2382
    %2471 = vmatpush1.bf16.msra.mxu0 %v2381
    %2472 = vmatprep.subr.bf16.mxu0 0
    %2473 = vmatpush1.bf16.msra.mxu0 0
    %2474 = vmatprep.subr.bf16.mxu0 0
    %2475 = vmatpush1.bf16.msra.mxu0 0
    %2476 = vmatprep.subr.bf16.mxu0 0
    %2477 = vmatpush1.bf16.msra.mxu0 0
    %2478 = vmatprep.subr.bf16.mxu0 0
    %2479 = vmatpush1.bf16.msra.mxu0 0
    %2480 = vmatprep.subr.bf16.mxu0 0
    %2481 = vmatpush1.bf16.msra.mxu0 0
    %2482 = vmatprep.subr.bf16.mxu0 0
    %2483 = vmatpush1.bf16.msra.mxu0 0
    %2484 = vmatprep.subr.bf16.mxu0 0
    %2485 = vmatpush1.bf16.msra.mxu0 0
    %2486 = vmatprep.subr.bf16.mxu0 0
    %2487 = vmatpush1.bf16.msra.mxu0 0
    %2488 = vmatprep.mubr.bf16.mxu0 0
    %2489 = vmatmul.mubr.bf16.gmra.mrb[0].mxu0 %v2222
    %v2490 = vpop.f32.mrb[0].mxu0
    %v2491 = vadd.f32 0.0, %v2490
    %v2492 = vpop.f32.mrb[0].mxu0
    %v2493 = vadd.f32 0.0, %v2492
    %v2494 = vpop.f32.mrb[0].mxu0
    %v2495 = vpop.f32.mrb[0].mxu0
    %2496 = vdwg.mxu0
    %v2497 = vadd.f32 %v2218, %v2450
    %v2498 = vadd.f32 %v2219, %v2452
    %v2499 = vadd.f32 %v2220, %v2491
    %v2500 = vadd.f32 %v2221, %v2493
    %v2501 = vxor.u32 %v2497, 2147483648
    %v2502 = vmul.f32 %v2501, 1.442695
    %v2503 = vpow.pop %v2502
    %v2504 = vadd.f32 %v2503, 1.0
    %v2505 = vrcp.pop %v2504
    %v2506 = vmul.f32 1.0, %v2505
    %v2507 = vxor.u32 %v2498, 2147483648
    %v2508 = vmul.f32 %v2507, 1.442695
    %v2509 = vpow.pop %v2508
    %v2510 = vadd.f32 %v2509, 1.0
    %v2511 = vrcp.pop %v2510
    %v2512 = vmul.f32 1.0, %v2511
    %v2513 = vtanh.pop %v2499
    %v2514 = vxor.u32 %v2500, 2147483648
    %v2515 = vmul.f32 %v2514, 1.442695
    %v2516 = vpow.pop %v2515
    %v2517 = vadd.f32 %v2516, 1.0
    %v2518 = vrcp.pop %v2517
    %v2519 = vmul.f32 1.0, %v2518
    %v2520 = vmul.f32 %v2512, %v2213
    %v2521 = vmul.f32 %v2506, %v2513
    %v2522 = vadd.f32 %v2520, %v2521
    %v2523 = vtanh.pop %v2522
    %v2524 = vmul.f32 %v2519, %v2523
    %s2525 = scalar_lea.vmem [#allocation11], 56
    %2526 = vst [vmem:[%s2525] sm:$0xff] %v2524
    %2527 = vst [vmem:[#allocation2] sm:$0xff] %v2524
    %2528 = vst [vmem:[#allocation3] sm:$0xff] %v2522
    %v2529 = vld [vmem:[#allocation3] sm:$0xff]
    %2530 = vst [vmem:[#allocation12] sm:$0xff] %v2529
    // Predicated region
    $region34: #{tpu_custom_call.1} parent=1 // pred_check
      _
    $region35: #{tpu_custom_call.1} parent=1 // pred_check_branch
      %2532 = sbr.rel (0) target = $region37
    $region36: #{tpu_custom_call.1} parent=1 // pred_region
      %s2534 = ssub.s32 1024, 1024
      %2535 = vsyncadd [#allocation7], %s2534
      %s2536 = sshll.u32 [#allocation11], 4
      %s2537 = int_to_ptr.vmem [resolvable:$true] %s2536
      %2542 = dma.vmem_to_hbm [thread:$0]  %s2537, 1024, %s4, [#allocation7], 128, 128, 8
    $region37: #{tpu_custom_call.1} parent=1 // pred_fallthru
      _
    // Predicated region
    $region38: #{tpu_custom_call.1} parent=1 // pred_check
      _
    $region39: #{tpu_custom_call.1} parent=1 // pred_check_branch
      %2544 = sbr.rel (0) target = $region41
    $region40: #{tpu_custom_call.1} parent=1 // pred_region
      %s2546 = ssub.s32 128, 128
      %2547 = vsyncadd [#allocation13], %s2546
      %s2549 = sshll.u32 [#allocation12], 4
      %s2550 = int_to_ptr.vmem [resolvable:$true] %s2549
      %2552 = dma.vmem_to_hbm [thread:$0]  %s2550, 128, %s5, [#allocation13]
    $region41: #{tpu_custom_call.1} parent=1 // pred_fallthru
      _
    // Predicated region
    $region42: #{tpu_custom_call.1} parent=1 // pred_check
      _
    $region43: #{tpu_custom_call.1} parent=1 // pred_check_branch
      %2554 = sbr.rel (0) target = $region45
    $region44: #{tpu_custom_call.1} parent=1 // pred_region
      %2555 = dma.done [#allocation7], 1024
    $region45: #{tpu_custom_call.1} parent=1 // pred_fallthru
      _
    // Predicated region
    $region46: #{tpu_custom_call.1} parent=1 // pred_check
      _
    $region47: #{tpu_custom_call.1} parent=1 // pred_check_branch
      %2557 = sbr.rel (0) target = $region49
    $region48: #{tpu_custom_call.1} parent=1 // pred_region
      %2558 = dma.done [#allocation13], 128
    $region49: #{tpu_custom_call.1} parent=1 // pred_fallthru
      _
    %2559 = vsyncpa [#allocation6], 1
    %2560 = vsyncpa [#allocation9], 1
    %2561 = vsyncpa [#allocation7], 1
    %2562 = vsyncpa [#allocation13], 1

</llo_original>
